<compile_context>
chip_gen: v7x
topology: tpu7x:2x2x1
jax: 0.10.0
libtpu: 0.0.40
codegen_flags: <defaults>
</compile_context>

<pallas_src>
import functools
import math

import jax
import jax.numpy as jnp
import numpy as np
from jax import lax
from jax.experimental import pallas as pl
from jax.experimental.pallas import tpu as pltpu


_WEIGHT_ORDER = ("weight", "lin_w_t", "lin_b", "merge_w_t", "merge_b",
                 "fc1_w_t", "fc1_b", "fc2_w_t", "fc2_b")


def _pack_weight_slab(params):
    """Row-concatenate all small weights into one VMEM slab.

    Each block is zero-padded to a multiple of 8 rows (sublane aligned) and to
    a common lane width, so the in-kernel static slices are aligned views.
    Returns (slab, offsets) with offsets[name] = (row0, rows_padded, rows, cols).
    """
    blocks = [params[k] for k in _WEIGHT_ORDER]
    slab_cols = max(int(b.shape[1]) for b in blocks)
    offsets = {}
    padded = []
    row0 = 0
    for name, b in zip(_WEIGHT_ORDER, blocks):
        r, c = int(b.shape[0]), int(b.shape[1])
        rp = -(-r // 8) * 8
        blk = jnp.zeros((rp, slab_cols), jnp.float32).at[:r, :c].set(
            b.astype(jnp.float32))
        padded.append(blk)
        offsets[name] = (row0, rp, r, c)
        row0 += rp
    return jnp.concatenate(padded, axis=0), offsets


# ----------------------- fused GraphTransformer kernel -----------------------
def _graph_transformer_kernel(
    wc_ref,        # SMEM ((L+1)*C*E,)        softmaxed GTConv weights, flattened
    a_ref,         # VMEM (E, N, N)           adjacency stack
    x_ref,         # VMEM (N, w_in)           node features
    wslab_ref,     # VMEM (slab_rows, slab_cols)  packed weights/biases
    out_ref,       # VMEM (N, w_out + nf)     [ sigmoid(merge(X_)) | decoder(x) ]
    *, num_layers, C, E, w_out, nf, offsets,
):
    N = a_ref.shape[1]
    f32 = jnp.float32

    def blk(name):
        # Static, 8-row-aligned slab slice -> in-register block of natural size.
        r0, rp, r, c = offsets[name]
        return wslab_ref[r0:r0 + rp, :][:r, :c]

    # Load each edge-type adjacency slice once (E is tiny & static).
    A = [a_ref[e] for e in range(E)]

    def conv(slot, c):
        # GTConv channel c, weight block `slot`: sum_e softmax(w)[c,e] * A[e]
        base = (slot * C + c) * E
        acc = wc_ref[base] * A[0]
        for e in range(1, E):
            acc = acc + wc_ref[base + e] * A[e]
        return acc

    row = lax.broadcasted_iota(jnp.int32, (N, N), 0)
    col = lax.broadcasted_iota(jnp.int32, (N, N), 1)
    diag = row == col

    def norm(h, add):
        # GTN.norm: zero diagonal (optionally +I), scale column j by 1/deg_j,
        # deg_j = column sum; 1/0 -> 0 (torch's isinf -> 0 semantics).
        hm = jnp.where(diag, f32(1.0 if add else 0.0), h)
        deg = jnp.sum(hm, axis=0, keepdims=True)              # (1, N)
        deg_inv = jnp.where(deg == 0.0, f32(0.0), 1.0 / deg)  # exact divide
        return hm * deg_inv

    # ---- GT layers (C / E / num_layers are small statics -> fully unrolled) ----
    H = []
    for c in range(C):
        a_c = conv(0, c)
        b_c = conv(1, c)
        H.append(jnp.dot(a_c, b_c, preferred_element_type=f32))
    for i in range(1, num_layers):
        for c in range(C):
            a_c = conv(i + 1, c)
            H[c] = jnp.dot(norm(H[c], add=False), a_c, preferred_element_type=f32)

    # ---- gcn_conv + ReLU (per channel), then linear1 as ONE matmul ----
    # X @ weight is channel-independent: compute it exactly once.
    xw = jnp.dot(x_ref[...], blk("weight"), preferred_element_type=f32)
    gcs = []
    for c in range(C):
        hn = norm(H[c], add=True)
        # hn^T @ xw: contract over hn's rows directly -> no XLU transpose.
        gc = lax.dot_general(hn, xw,
                             dimension_numbers=(((0,), (0,)), ((), ())),
                             preferred_element_type=f32)
        gcs.append(jnp.maximum(gc, 0.0))
    gc_cat = jnp.concatenate(gcs, axis=1)                 # (N, C*w_out), in vregs
    x_lin = jnp.maximum(
        jnp.dot(gc_cat, blk("lin_w_t"), preferred_element_type=f32) + blk("lin_b"),
        0.0)                                              # relu(linear1(X_))

    # ---- merge Linear + sigmoid (reciprocal on the EUP slot) ----
    xm = jnp.dot(x_lin, blk("merge_w_t"), preferred_element_type=f32) + blk("merge_b")
    xm = pl.reciprocal(1.0 + jnp.exp(-xm), approx=False)

    # ---- GeneDecoder: fc1 + ReLU (+ dropout) + fc2 ----
    # TODO(synk): Dropout(p=0.5) is treated as eval-mode identity (no RNG in-kernel).
    h1 = jnp.maximum(
        jnp.dot(xm, blk("fc1_w_t"), preferred_element_type=f32) + blk("fc1_b"), 0.0)
    rec = jnp.dot(h1, blk("fc2_w_t"), preferred_element_type=f32) + blk("fc2_b")

    # Single lane-contiguous output slab: [ xm | rec ].
    out_ref[...] = jnp.concatenate([xm, rec], axis=1)


# --------------------------------- wrapper -----------------------------------
def graph_transformer_forward(A, X, params, num_layers, num_channels):
    """Full GraphTransformer forward: returns (x, reconstructed_x, Ws)."""
    E, N, _ = A.shape
    w_out = params["weight"].shape[1]
    nf = params["fc2_w_t"].shape[1]
    C = num_channels

    # Softmaxed GTConv weights (also returned as Ws, like the torch module).
    w_soft = [jax.nn.softmax(w, axis=1) for w in params["conv_w"]]      # (C, E) each
    Ws = [[w_soft[0], w_soft[1]]] + [[w_soft[i + 1]] for i in range(1, num_layers)]
    wc_flat = jnp.stack(w_soft, axis=0).reshape(-1)                     # ((L+1)*C*E,)

    slab, offsets = _pack_weight_slab(params)

    kernel = functools.partial(_graph_transformer_kernel,
                               num_layers=num_layers, C=C, E=E,
                               w_out=w_out, nf=nf, offsets=offsets)
    vmem = pl.BlockSpec(memory_space=pltpu.MemorySpace.VMEM)
    smem = pl.BlockSpec(memory_space=pltpu.MemorySpace.SMEM)

    out = pl.pallas_call(
        kernel,
        out_shape=jax.ShapeDtypeStruct((N, w_out + nf), jnp.float32),
        in_specs=[smem, vmem, vmem, vmem],
        out_specs=vmem,
    )(wc_flat, A, X, slab)
    x_m = out[:, :w_out]
    rec = out[:, w_out:w_out + nf]
    return x_m, rec, Ws


# ----------------------------- plain-JAX reference ----------------------------
def _ref_norm(H, add):
    N = H.shape[0]
    eye = jnp.eye(N, dtype=jnp.float32)
    hm = H * (1.0 - eye) + (eye if add else 0.0)
    deg = jnp.sum(hm, axis=0)
    deg_inv = jnp.where(deg == 0.0, 0.0, 1.0 / deg)
    return hm * deg_inv[None, :]


def ref_forward(A, X, params, num_layers, C):
    H = None
    for i in range(num_layers):
        if i == 0:
            w1 = jax.nn.softmax(params["conv_w"][0], axis=1)
            w2 = jax.nn.softmax(params["conv_w"][1], axis=1)
            a = jnp.einsum("ce,enm->cnm", w1, A)
            b = jnp.einsum("ce,enm->cnm", w2, A)
            H = jnp.einsum("cij,cjk->cik", a, b)
        else:
            w1 = jax.nn.softmax(params["conv_w"][i + 1], axis=1)
            Hn = jnp.stack([_ref_norm(H[c], False) for c in range(C)])
            a = jnp.einsum("ce,enm->cnm", w1, A)
            H = jnp.einsum("cij,cjk->cik", Hn, a)
    xw = X @ params["weight"]
    outs = [jax.nn.relu(_ref_norm(H[c], True).T @ xw) for c in range(C)]
    x_cat = jnp.concatenate(outs, axis=1)
    x_lin = jax.nn.relu(x_cat @ params["lin_w_t"] + params["lin_b"])
    xm = 1.0 / (1.0 + jnp.exp(-(x_lin @ params["merge_w_t"] + params["merge_b"])))
    h1 = jax.nn.relu(xm @ params["fc1_w_t"] + params["fc1_b"])
    rec = h1 @ params["fc2_w_t"] + params["fc2_b"]
    return xm, rec


# ----------------------------------- main -------------------------------------
if __name__ == "__main__":
    # GraphTransformer hyperparameters (small, consistent with the module).
    num_features_exp = 8          # w_in and decoder output size
    hidden_channels = 16          # w_out (== num_class)
    num_layers = 2
    num_edge = 4                  # edge types (GTConv in_channels)
    num_channels = 2              # GTConv out_channels
    N = 16                        # number of nodes
    # NOTE: nr_heads, GTN.bias and GTConv.scale are declared but unused in forward.

    key = jax.random.PRNGKey(0)
    keys = jax.random.split(key, 12)

    # Adjacency stack (what edge_index_to_adj would produce, one (N,N) per edge type).
    A = (jax.random.uniform(keys[0], (num_edge, N, N)) < 0.4).astype(jnp.float32)
    A = A.at[:, :, 0].set(0.0)    # force a zero-degree column -> exercises 1/0 -> 0 path
    X = jax.random.uniform(keys[1], (N, num_features_exp), dtype=jnp.float32)

    # GTConv weights as (C, E): [layer0.conv1, layer0.conv2, layer_i.conv1, ...].
    # (torch init is constant 0.1; randomized here so weight routing is actually tested)
    conv_w = [0.1 + 0.05 * jax.random.normal(keys[2 + i], (num_channels, num_edge),
                                             dtype=jnp.float32)
              for i in range(num_layers + 1)]

    def xavier(k, shape):
        bound = math.sqrt(6.0 / (shape[0] + shape[1]))
        return jax.random.uniform(k, shape, jnp.float32, -bound, bound)

    w_in, w_out = num_features_exp, hidden_channels
    params = dict(
        conv_w=conv_w,
        weight=xavier(keys[5], (w_in, w_out)),                        # GTN.weight
        lin_w_t=xavier(keys[6], (num_channels * w_out, w_out)),       # linear1.weight^T
        lin_b=0.05 * jax.random.normal(keys[7], (1, w_out), jnp.float32),
        merge_w_t=xavier(keys[8], (w_out, w_out)),                    # merge.weight^T
        merge_b=jnp.zeros((1, w_out), jnp.float32),                   # _init_weights -> 0
        fc1_w_t=xavier(keys[9], (w_out, 2 * w_out)),                  # decoder.fc1^T
        fc1_b=0.05 * jax.random.normal(keys[10], (1, 2 * w_out), jnp.float32),
        fc2_w_t=xavier(keys[11], (2 * w_out, num_features_exp)),      # decoder.fc2^T
        fc2_b=jnp.zeros((1, num_features_exp), jnp.float32),
    )

    fwd = jax.jit(graph_transformer_forward, static_argnums=(3, 4))
    x, rec, Ws = fwd(A, X, params, num_layers, num_channels)
    x = jax.block_until_ready(x)
    rec = jax.block_until_ready(rec)

    x_ref, rec_ref = ref_forward(A, X, params, num_layers, num_channels)
    np.testing.assert_allclose(np.asarray(x), np.asarray(x_ref), rtol=1e-4, atol=1e-4)
    np.testing.assert_allclose(np.asarray(rec), np.asarray(rec_ref), rtol=1e-4, atol=1e-4)

    print("KERNEL_OK")
</pallas_src>

<mosaic_0001>
module attributes {stable_mosaic.version = 11 : i64} {
  func.func @_graph_transformer_kernel(%arg0: memref<24xf32, #tpu.memory_space<smem>>, %arg1: memref<4x16x16xf32, #tpu.memory_space<vmem>>, %arg2: memref<16x8xf32, #tpu.memory_space<vmem>>, %arg3: memref<136x32xf32, #tpu.memory_space<vmem>>, %arg4: memref<16x24xf32, #tpu.memory_space<vmem>>) attributes {dimension_semantics = [], scalar_prefetch = 0 : i64, scratch_operands = 0 : i64, tpu.core_type = #tpu.core_type<tc>} {
    %c0 = arith.constant 0 : index
    %c0_0 = arith.constant 0 : index
    %c0_1 = arith.constant 0 : index
    %0 = vector.load %arg1[%c0, %c0_0, %c0_1] : memref<4x16x16xf32, #tpu.memory_space<vmem>>, vector<1x16x16xf32>
    %1 = vector.shape_cast %0 : vector<1x16x16xf32> to vector<16x16xf32>
    %c1 = arith.constant 1 : index
    %c0_2 = arith.constant 0 : index
    %c0_3 = arith.constant 0 : index
    %2 = vector.load %arg1[%c1, %c0_2, %c0_3] : memref<4x16x16xf32, #tpu.memory_space<vmem>>, vector<1x16x16xf32>
    %3 = vector.shape_cast %2 : vector<1x16x16xf32> to vector<16x16xf32>
    %c2 = arith.constant 2 : index
    %c0_4 = arith.constant 0 : index
    %c0_5 = arith.constant 0 : index
    %4 = vector.load %arg1[%c2, %c0_4, %c0_5] : memref<4x16x16xf32, #tpu.memory_space<vmem>>, vector<1x16x16xf32>
    %5 = vector.shape_cast %4 : vector<1x16x16xf32> to vector<16x16xf32>
    %c3 = arith.constant 3 : index
    %c0_6 = arith.constant 0 : index
    %c0_7 = arith.constant 0 : index
    %6 = vector.load %arg1[%c3, %c0_6, %c0_7] : memref<4x16x16xf32, #tpu.memory_space<vmem>>, vector<1x16x16xf32>
    %7 = vector.shape_cast %6 : vector<1x16x16xf32> to vector<16x16xf32>
    %8 = tpu.iota {dimensions = array<i32: 0>} : vector<16x16xi32>
    %9 = tpu.iota {dimensions = array<i32: 1>} : vector<16x16xi32>
    %10 = arith.cmpi eq, %8, %9 : vector<16x16xi32>
    %c0_8 = arith.constant 0 : index
    %11 = memref.load %arg0[%c0_8] : memref<24xf32, #tpu.memory_space<smem>>
    %12 = vector.broadcast %11 : f32 to vector<16x16xf32>
    %13 = arith.mulf %12, %1 : vector<16x16xf32>
    %c1_9 = arith.constant 1 : index
    %14 = memref.load %arg0[%c1_9] : memref<24xf32, #tpu.memory_space<smem>>
    %15 = vector.broadcast %14 : f32 to vector<16x16xf32>
    %16 = arith.mulf %15, %3 : vector<16x16xf32>
    %17 = arith.addf %13, %16 : vector<16x16xf32>
    %c2_10 = arith.constant 2 : index
    %18 = memref.load %arg0[%c2_10] : memref<24xf32, #tpu.memory_space<smem>>
    %19 = vector.broadcast %18 : f32 to vector<16x16xf32>
    %20 = arith.mulf %19, %5 : vector<16x16xf32>
    %21 = arith.addf %17, %20 : vector<16x16xf32>
    %c3_11 = arith.constant 3 : index
    %22 = memref.load %arg0[%c3_11] : memref<24xf32, #tpu.memory_space<smem>>
    %23 = vector.broadcast %22 : f32 to vector<16x16xf32>
    %24 = arith.mulf %23, %7 : vector<16x16xf32>
    %25 = arith.addf %21, %24 : vector<16x16xf32>
    %c8 = arith.constant 8 : index
    %26 = memref.load %arg0[%c8] : memref<24xf32, #tpu.memory_space<smem>>
    %27 = vector.broadcast %26 : f32 to vector<16x16xf32>
    %28 = arith.mulf %27, %1 : vector<16x16xf32>
    %c9 = arith.constant 9 : index
    %29 = memref.load %arg0[%c9] : memref<24xf32, #tpu.memory_space<smem>>
    %30 = vector.broadcast %29 : f32 to vector<16x16xf32>
    %31 = arith.mulf %30, %3 : vector<16x16xf32>
    %32 = arith.addf %28, %31 : vector<16x16xf32>
    %c10 = arith.constant 10 : index
    %33 = memref.load %arg0[%c10] : memref<24xf32, #tpu.memory_space<smem>>
    %34 = vector.broadcast %33 : f32 to vector<16x16xf32>
    %35 = arith.mulf %34, %5 : vector<16x16xf32>
    %36 = arith.addf %32, %35 : vector<16x16xf32>
    %c11 = arith.constant 11 : index
    %37 = memref.load %arg0[%c11] : memref<24xf32, #tpu.memory_space<smem>>
    %38 = vector.broadcast %37 : f32 to vector<16x16xf32>
    %39 = arith.mulf %38, %7 : vector<16x16xf32>
    %40 = arith.addf %36, %39 : vector<16x16xf32>
    %cst = arith.constant dense<0.000000e+00> : vector<16x16xf32>
    %41 = tpu.matmul %25, %40, %cst {dimension_numbers = #tpu.dot_dimension_numbers<[1], [0], [0], [1], [0, 0, 1, 1], [], []>} : vector<16x16xf32>, vector<16x16xf32>, vector<16x16xf32> -> vector<16x16xf32>
    %c4 = arith.constant 4 : index
    %42 = memref.load %arg0[%c4] : memref<24xf32, #tpu.memory_space<smem>>
    %43 = vector.broadcast %42 : f32 to vector<16x16xf32>
    %44 = arith.mulf %43, %1 : vector<16x16xf32>
    %c5 = arith.constant 5 : index
    %45 = memref.load %arg0[%c5] : memref<24xf32, #tpu.memory_space<smem>>
    %46 = vector.broadcast %45 : f32 to vector<16x16xf32>
    %47 = arith.mulf %46, %3 : vector<16x16xf32>
    %48 = arith.addf %44, %47 : vector<16x16xf32>
    %c6 = arith.constant 6 : index
    %49 = memref.load %arg0[%c6] : memref<24xf32, #tpu.memory_space<smem>>
    %50 = vector.broadcast %49 : f32 to vector<16x16xf32>
    %51 = arith.mulf %50, %5 : vector<16x16xf32>
    %52 = arith.addf %48, %51 : vector<16x16xf32>
    %c7 = arith.constant 7 : index
    %53 = memref.load %arg0[%c7] : memref<24xf32, #tpu.memory_space<smem>>
    %54 = vector.broadcast %53 : f32 to vector<16x16xf32>
    %55 = arith.mulf %54, %7 : vector<16x16xf32>
    %56 = arith.addf %52, %55 : vector<16x16xf32>
    %c12 = arith.constant 12 : index
    %57 = memref.load %arg0[%c12] : memref<24xf32, #tpu.memory_space<smem>>
    %58 = vector.broadcast %57 : f32 to vector<16x16xf32>
    %59 = arith.mulf %58, %1 : vector<16x16xf32>
    %c13 = arith.constant 13 : index
    %60 = memref.load %arg0[%c13] : memref<24xf32, #tpu.memory_space<smem>>
    %61 = vector.broadcast %60 : f32 to vector<16x16xf32>
    %62 = arith.mulf %61, %3 : vector<16x16xf32>
    %63 = arith.addf %59, %62 : vector<16x16xf32>
    %c14 = arith.constant 14 : index
    %64 = memref.load %arg0[%c14] : memref<24xf32, #tpu.memory_space<smem>>
    %65 = vector.broadcast %64 : f32 to vector<16x16xf32>
    %66 = arith.mulf %65, %5 : vector<16x16xf32>
    %67 = arith.addf %63, %66 : vector<16x16xf32>
    %c15 = arith.constant 15 : index
    %68 = memref.load %arg0[%c15] : memref<24xf32, #tpu.memory_space<smem>>
    %69 = vector.broadcast %68 : f32 to vector<16x16xf32>
    %70 = arith.mulf %69, %7 : vector<16x16xf32>
    %71 = arith.addf %67, %70 : vector<16x16xf32>
    %cst_12 = arith.constant dense<0.000000e+00> : vector<16x16xf32>
    %72 = tpu.matmul %56, %71, %cst_12 {dimension_numbers = #tpu.dot_dimension_numbers<[1], [0], [0], [1], [0, 0, 1, 1], [], []>} : vector<16x16xf32>, vector<16x16xf32>, vector<16x16xf32> -> vector<16x16xf32>
    %c16 = arith.constant 16 : index
    %73 = memref.load %arg0[%c16] : memref<24xf32, #tpu.memory_space<smem>>
    %74 = vector.broadcast %73 : f32 to vector<16x16xf32>
    %75 = arith.mulf %74, %1 : vector<16x16xf32>
    %c17 = arith.constant 17 : index
    %76 = memref.load %arg0[%c17] : memref<24xf32, #tpu.memory_space<smem>>
    %77 = vector.broadcast %76 : f32 to vector<16x16xf32>
    %78 = arith.mulf %77, %3 : vector<16x16xf32>
    %79 = arith.addf %75, %78 : vector<16x16xf32>
    %c18 = arith.constant 18 : index
    %80 = memref.load %arg0[%c18] : memref<24xf32, #tpu.memory_space<smem>>
    %81 = vector.broadcast %80 : f32 to vector<16x16xf32>
    %82 = arith.mulf %81, %5 : vector<16x16xf32>
    %83 = arith.addf %79, %82 : vector<16x16xf32>
    %c19 = arith.constant 19 : index
    %84 = memref.load %arg0[%c19] : memref<24xf32, #tpu.memory_space<smem>>
    %85 = vector.broadcast %84 : f32 to vector<16x16xf32>
    %86 = arith.mulf %85, %7 : vector<16x16xf32>
    %87 = arith.addf %83, %86 : vector<16x16xf32>
    %cst_13 = arith.constant 0.000000e+00 : f32
    %88 = vector.broadcast %cst_13 : f32 to vector<16x16xf32>
    %89 = arith.select %10, %88, %41 : vector<16x16xi1>, vector<16x16xf32>
    %cst_14 = arith.constant dense<0.000000e+00> : vector<16xf32>
    %90 = vector.multi_reduction <add>, %89, %cst_14 [0] : vector<16x16xf32> to vector<16xf32>
    %91 = vector.shape_cast %90 : vector<16xf32> to vector<1x16xf32>
    %cst_15 = arith.constant 0.000000e+00 : f32
    %92 = vector.broadcast %cst_15 : f32 to vector<1x16xf32>
    %93 = arith.cmpf oeq, %91, %92 : vector<1x16xf32>
    %cst_16 = arith.constant 1.000000e+00 : f32
    %94 = vector.broadcast %cst_16 : f32 to vector<1x16xf32>
    %95 = arith.divf %94, %91 : vector<1x16xf32>
    %cst_17 = arith.constant 0.000000e+00 : f32
    %96 = vector.broadcast %cst_17 : f32 to vector<1x16xf32>
    %97 = arith.select %93, %96, %95 : vector<1x16xi1>, vector<1x16xf32>
    %98 = vector.broadcast %97 : vector<1x16xf32> to vector<16x16xf32>
    %99 = arith.mulf %89, %98 : vector<16x16xf32>
    %cst_18 = arith.constant dense<0.000000e+00> : vector<16x16xf32>
    %100 = tpu.matmul %99, %87, %cst_18 {dimension_numbers = #tpu.dot_dimension_numbers<[1], [0], [0], [1], [0, 0, 1, 1], [], []>} : vector<16x16xf32>, vector<16x16xf32>, vector<16x16xf32> -> vector<16x16xf32>
    %c20 = arith.constant 20 : index
    %101 = memref.load %arg0[%c20] : memref<24xf32, #tpu.memory_space<smem>>
    %102 = vector.broadcast %101 : f32 to vector<16x16xf32>
    %103 = arith.mulf %102, %1 : vector<16x16xf32>
    %c21 = arith.constant 21 : index
    %104 = memref.load %arg0[%c21] : memref<24xf32, #tpu.memory_space<smem>>
    %105 = vector.broadcast %104 : f32 to vector<16x16xf32>
    %106 = arith.mulf %105, %3 : vector<16x16xf32>
    %107 = arith.addf %103, %106 : vector<16x16xf32>
    %c22 = arith.constant 22 : index
    %108 = memref.load %arg0[%c22] : memref<24xf32, #tpu.memory_space<smem>>
    %109 = vector.broadcast %108 : f32 to vector<16x16xf32>
    %110 = arith.mulf %109, %5 : vector<16x16xf32>
    %111 = arith.addf %107, %110 : vector<16x16xf32>
    %c23 = arith.constant 23 : index
    %112 = memref.load %arg0[%c23] : memref<24xf32, #tpu.memory_space<smem>>
    %113 = vector.broadcast %112 : f32 to vector<16x16xf32>
    %114 = arith.mulf %113, %7 : vector<16x16xf32>
    %115 = arith.addf %111, %114 : vector<16x16xf32>
    %cst_19 = arith.constant 0.000000e+00 : f32
    %116 = vector.broadcast %cst_19 : f32 to vector<16x16xf32>
    %117 = arith.select %10, %116, %72 : vector<16x16xi1>, vector<16x16xf32>
    %cst_20 = arith.constant dense<0.000000e+00> : vector<16xf32>
    %118 = vector.multi_reduction <add>, %117, %cst_20 [0] : vector<16x16xf32> to vector<16xf32>
    %119 = vector.shape_cast %118 : vector<16xf32> to vector<1x16xf32>
    %cst_21 = arith.constant 0.000000e+00 : f32
    %120 = vector.broadcast %cst_21 : f32 to vector<1x16xf32>
    %121 = arith.cmpf oeq, %119, %120 : vector<1x16xf32>
    %cst_22 = arith.constant 1.000000e+00 : f32
    %122 = vector.broadcast %cst_22 : f32 to vector<1x16xf32>
    %123 = arith.divf %122, %119 : vector<1x16xf32>
    %cst_23 = arith.constant 0.000000e+00 : f32
    %124 = vector.broadcast %cst_23 : f32 to vector<1x16xf32>
    %125 = arith.select %121, %124, %123 : vector<1x16xi1>, vector<1x16xf32>
    %126 = vector.broadcast %125 : vector<1x16xf32> to vector<16x16xf32>
    %127 = arith.mulf %117, %126 : vector<16x16xf32>
    %cst_24 = arith.constant dense<0.000000e+00> : vector<16x16xf32>
    %128 = tpu.matmul %127, %115, %cst_24 {dimension_numbers = #tpu.dot_dimension_numbers<[1], [0], [0], [1], [0, 0, 1, 1], [], []>} : vector<16x16xf32>, vector<16x16xf32>, vector<16x16xf32> -> vector<16x16xf32>
    %c0_25 = arith.constant 0 : index
    %c0_26 = arith.constant 0 : index
    %129 = vector.load %arg2[%c0_25, %c0_26] : memref<16x8xf32, #tpu.memory_space<vmem>>, vector<16x8xf32>
    %c0_27 = arith.constant 0 : index
    %c0_28 = arith.constant 0 : index
    %130 = vector.load %arg3[%c0_27, %c0_28] : memref<136x32xf32, #tpu.memory_space<vmem>>, vector<8x32xf32>
    %131 = vector.extract_strided_slice %130 {offsets = [0, 0], sizes = [8, 16], strides = [1, 1]} : vector<8x32xf32> to vector<8x16xf32>
    %cst_29 = arith.constant dense<0.000000e+00> : vector<16x16xf32>
    %132 = tpu.matmul %129, %131, %cst_29 {dimension_numbers = #tpu.dot_dimension_numbers<[1], [0], [0], [1], [0, 0, 1, 1], [], []>} : vector<16x8xf32>, vector<8x16xf32>, vector<16x16xf32> -> vector<16x16xf32>
    %cst_30 = arith.constant 1.000000e+00 : f32
    %133 = vector.broadcast %cst_30 : f32 to vector<16x16xf32>
    %134 = arith.select %10, %133, %100 : vector<16x16xi1>, vector<16x16xf32>
    %cst_31 = arith.constant dense<0.000000e+00> : vector<16xf32>
    %135 = vector.multi_reduction <add>, %134, %cst_31 [0] : vector<16x16xf32> to vector<16xf32>
    %136 = vector.shape_cast %135 : vector<16xf32> to vector<1x16xf32>
    %cst_32 = arith.constant 0.000000e+00 : f32
    %137 = vector.broadcast %cst_32 : f32 to vector<1x16xf32>
    %138 = arith.cmpf oeq, %136, %137 : vector<1x16xf32>
    %cst_33 = arith.constant 1.000000e+00 : f32
    %139 = vector.broadcast %cst_33 : f32 to vector<1x16xf32>
    %140 = arith.divf %139, %136 : vector<1x16xf32>
    %cst_34 = arith.constant 0.000000e+00 : f32
    %141 = vector.broadcast %cst_34 : f32 to vector<1x16xf32>
    %142 = arith.select %138, %141, %140 : vector<1x16xi1>, vector<1x16xf32>
    %143 = vector.broadcast %142 : vector<1x16xf32> to vector<16x16xf32>
    %144 = arith.mulf %134, %143 : vector<16x16xf32>
    %cst_35 = arith.constant dense<0.000000e+00> : vector<16x16xf32>
    %145 = tpu.matmul %144, %132, %cst_35 {dimension_numbers = #tpu.dot_dimension_numbers<[0], [0], [1], [1], [0, 1, 1, 1], [], []>} : vector<16x16xf32>, vector<16x16xf32>, vector<16x16xf32> -> vector<16x16xf32>
    %cst_36 = arith.constant 0.000000e+00 : f32
    %146 = vector.broadcast %cst_36 : f32 to vector<16x16xf32>
    %147 = arith.maximumf %145, %146 : vector<16x16xf32>
    %cst_37 = arith.constant 1.000000e+00 : f32
    %148 = vector.broadcast %cst_37 : f32 to vector<16x16xf32>
    %149 = arith.select %10, %148, %128 : vector<16x16xi1>, vector<16x16xf32>
    %cst_38 = arith.constant dense<0.000000e+00> : vector<16xf32>
    %150 = vector.multi_reduction <add>, %149, %cst_38 [0] : vector<16x16xf32> to vector<16xf32>
    %151 = vector.shape_cast %150 : vector<16xf32> to vector<1x16xf32>
    %cst_39 = arith.constant 0.000000e+00 : f32
    %152 = vector.broadcast %cst_39 : f32 to vector<1x16xf32>
    %153 = arith.cmpf oeq, %151, %152 : vector<1x16xf32>
    %cst_40 = arith.constant 1.000000e+00 : f32
    %154 = vector.broadcast %cst_40 : f32 to vector<1x16xf32>
    %155 = arith.divf %154, %151 : vector<1x16xf32>
    %cst_41 = arith.constant 0.000000e+00 : f32
    %156 = vector.broadcast %cst_41 : f32 to vector<1x16xf32>
    %157 = arith.select %153, %156, %155 : vector<1x16xi1>, vector<1x16xf32>
    %158 = vector.broadcast %157 : vector<1x16xf32> to vector<16x16xf32>
    %159 = arith.mulf %149, %158 : vector<16x16xf32>
    %cst_42 = arith.constant dense<0.000000e+00> : vector<16x16xf32>
    %160 = tpu.matmul %159, %132, %cst_42 {dimension_numbers = #tpu.dot_dimension_numbers<[0], [0], [1], [1], [0, 1, 1, 1], [], []>} : vector<16x16xf32>, vector<16x16xf32>, vector<16x16xf32> -> vector<16x16xf32>
    %cst_43 = arith.constant 0.000000e+00 : f32
    %161 = vector.broadcast %cst_43 : f32 to vector<16x16xf32>
    %162 = arith.maximumf %160, %161 : vector<16x16xf32>
    %163 = tpu.concatenate %147, %162 in 1 : vector<16x16xf32>, vector<16x16xf32> -> vector<16x32xf32>
    %c8_44 = arith.constant 8 : index
    %c0_45 = arith.constant 0 : index
    %164 = vector.load %arg3[%c8_44, %c0_45] : memref<136x32xf32, #tpu.memory_space<vmem>>, vector<32x32xf32>
    %165 = vector.extract_strided_slice %164 {offsets = [0, 0], sizes = [32, 16], strides = [1, 1]} : vector<32x32xf32> to vector<32x16xf32>
    %cst_46 = arith.constant dense<0.000000e+00> : vector<16x16xf32>
    %166 = tpu.matmul %163, %165, %cst_46 {dimension_numbers = #tpu.dot_dimension_numbers<[1], [0], [0], [1], [0, 0, 1, 1], [], []>} : vector<16x32xf32>, vector<32x16xf32>, vector<16x16xf32> -> vector<16x16xf32>
    %c40 = arith.constant 40 : index
    %c0_47 = arith.constant 0 : index
    %167 = vector.load %arg3[%c40, %c0_47] : memref<136x32xf32, #tpu.memory_space<vmem>>, vector<8x32xf32>
    %168 = vector.extract_strided_slice %167 {offsets = [0, 0], sizes = [1, 16], strides = [1, 1]} : vector<8x32xf32> to vector<1x16xf32>
    %169 = vector.broadcast %168 : vector<1x16xf32> to vector<16x16xf32>
    %170 = arith.addf %166, %169 : vector<16x16xf32>
    %cst_48 = arith.constant 0.000000e+00 : f32
    %171 = vector.broadcast %cst_48 : f32 to vector<16x16xf32>
    %172 = arith.maximumf %170, %171 : vector<16x16xf32>
    %c48 = arith.constant 48 : index
    %c0_49 = arith.constant 0 : index
    %173 = vector.load %arg3[%c48, %c0_49] : memref<136x32xf32, #tpu.memory_space<vmem>>, vector<16x32xf32>
    %174 = vector.extract_strided_slice %173 {offsets = [0, 0], sizes = [16, 16], strides = [1, 1]} : vector<16x32xf32> to vector<16x16xf32>
    %cst_50 = arith.constant dense<0.000000e+00> : vector<16x16xf32>
    %175 = tpu.matmul %172, %174, %cst_50 {dimension_numbers = #tpu.dot_dimension_numbers<[1], [0], [0], [1], [0, 0, 1, 1], [], []>} : vector<16x16xf32>, vector<16x16xf32>, vector<16x16xf32> -> vector<16x16xf32>
    %c64 = arith.constant 64 : index
    %c0_51 = arith.constant 0 : index
    %176 = vector.load %arg3[%c64, %c0_51] : memref<136x32xf32, #tpu.memory_space<vmem>>, vector<8x32xf32>
    %177 = vector.extract_strided_slice %176 {offsets = [0, 0], sizes = [1, 16], strides = [1, 1]} : vector<8x32xf32> to vector<1x16xf32>
    %178 = vector.broadcast %177 : vector<1x16xf32> to vector<16x16xf32>
    %179 = arith.addf %175, %178 : vector<16x16xf32>
    %cst_52 = arith.constant 0.000000e+00 : f32
    %180 = vector.broadcast %cst_52 : f32 to vector<16x16xf32>
    %181 = arith.subf %180, %179 : vector<16x16xf32>
    %182 = math.exp %181 : vector<16x16xf32>
    %cst_53 = arith.constant 1.000000e+00 : f32
    %183 = vector.broadcast %cst_53 : f32 to vector<16x16xf32>
    %184 = arith.addf %183, %182 : vector<16x16xf32>
    %185 = tpu.reciprocal %184 : vector<16x16xf32> -> vector<16x16xf32>
    %c72 = arith.constant 72 : index
    %c0_54 = arith.constant 0 : index
    %186 = vector.load %arg3[%c72, %c0_54] : memref<136x32xf32, #tpu.memory_space<vmem>>, vector<16x32xf32>
    %cst_55 = arith.constant dense<0.000000e+00> : vector<16x32xf32>
    %187 = tpu.matmul %185, %186, %cst_55 {dimension_numbers = #tpu.dot_dimension_numbers<[1], [0], [0], [1], [0, 0, 1, 1], [], []>} : vector<16x16xf32>, vector<16x32xf32>, vector<16x32xf32> -> vector<16x32xf32>
    %c88 = arith.constant 88 : index
    %c0_56 = arith.constant 0 : index
    %188 = vector.load %arg3[%c88, %c0_56] : memref<136x32xf32, #tpu.memory_space<vmem>>, vector<8x32xf32>
    %189 = vector.extract_strided_slice %188 {offsets = [0, 0], sizes = [1, 32], strides = [1, 1]} : vector<8x32xf32> to vector<1x32xf32>
    %190 = vector.broadcast %189 : vector<1x32xf32> to vector<16x32xf32>
    %191 = arith.addf %187, %190 : vector<16x32xf32>
    %cst_57 = arith.constant 0.000000e+00 : f32
    %192 = vector.broadcast %cst_57 : f32 to vector<16x32xf32>
    %193 = arith.maximumf %191, %192 : vector<16x32xf32>
    %c96 = arith.constant 96 : index
    %c0_58 = arith.constant 0 : index
    %194 = vector.load %arg3[%c96, %c0_58] : memref<136x32xf32, #tpu.memory_space<vmem>>, vector<32x32xf32>
    %195 = vector.extract_strided_slice %194 {offsets = [0, 0], sizes = [32, 8], strides = [1, 1]} : vector<32x32xf32> to vector<32x8xf32>
    %cst_59 = arith.constant dense<0.000000e+00> : vector<16x8xf32>
    %196 = tpu.matmul %193, %195, %cst_59 {dimension_numbers = #tpu.dot_dimension_numbers<[1], [0], [0], [1], [0, 0, 1, 1], [], []>} : vector<16x32xf32>, vector<32x8xf32>, vector<16x8xf32> -> vector<16x8xf32>
    %c128 = arith.constant 128 : index
    %c0_60 = arith.constant 0 : index
    %197 = vector.load %arg3[%c128, %c0_60] : memref<136x32xf32, #tpu.memory_space<vmem>>, vector<8x32xf32>
    %198 = vector.extract_strided_slice %197 {offsets = [0, 0], sizes = [1, 8], strides = [1, 1]} : vector<8x32xf32> to vector<1x8xf32>
    %199 = vector.broadcast %198 : vector<1x8xf32> to vector<16x8xf32>
    %200 = arith.addf %196, %199 : vector<16x8xf32>
    %201 = tpu.concatenate %185, %200 in 1 : vector<16x16xf32>, vector<16x8xf32> -> vector<16x24xf32>
    %c0_61 = arith.constant 0 : index
    %c0_62 = arith.constant 0 : index
    %202 = vector.load %arg4[%c0_61, %c0_62] : memref<16x24xf32, #tpu.memory_space<vmem>>, vector<16x24xf32>
    tpu.vector_store %arg4[%c0_61, %c0_62], %201 {strides = array<i32>} : memref<16x24xf32, #tpu.memory_space<vmem>>, vector<16x24xf32>,
    return
  }
}

</mosaic_0001>

<llo_original>
// kernel: graph_transformer_forward.1
$region0: #{graph_transformer_forward.1}
  #allocation0 [shape = 'u32[]', space=smem, size = 0x4, offset = 0x4, fixed_abs, tag = 'smem constant byte address 0x4 - core index']
  #allocation1 [shape = 'u32[144,128]{1,0:T(1,128)}', space=vmem, size = 0x12000, scoped, tag = 'internal scratch']
  %s0 = inlined_call_operand.vmem [shape: f32[24], index: 0, kind: input, shape index: {}]
  %s1 = inlined_call_operand.vmem [shape: f32[4,16,16], index: 1, kind: input, shape index: {}]
  %s2 = inlined_call_operand.vmem [shape: f32[16,8], index: 2, kind: input, shape index: {}]
  %s3 = inlined_call_operand.vmem [shape: f32[136,32], index: 3, kind: input, shape index: {}]
  %s4 = inlined_call_operand.vmem [shape: f32[16,24], index: 4, kind: output, shape index: {}]
  %s5 = sld [smem:[#allocation0]]
  $region30: #{graph_transformer_forward.1} parent=0
    _
  %s7 = ssub.s32 1, %s5
  %s8 = scalar_select 0, %s7, %s5
  $region1: #{graph_transformer_forward.1} parent=0
    #allocation2 [shape = 'u8[512]{0}', space=smem, size = 0x200, scoped, tag = 'input window, operand 0, single buffered']
    #allocation3 [shape = 's32[1]{0}', space=sflag, size = 0x4, scoped, tag = 'scoped memory for graph_transformer_forward.1']
    %9 = vsyncpa [#allocation3], 0
    // Predicated region
    $region2: #{graph_transformer_forward.1} parent=1 // pred_check
      _
    $region3: #{graph_transformer_forward.1} parent=1 // pred_check_branch
      %11 = sbr.rel (0) target = $region5
    $region4: #{graph_transformer_forward.1} parent=1 // pred_region
      %s13 = ssub.s32 16, 16
      %14 = vsyncadd [#allocation3], %s13
      %s16 = sshll.u32 %s0, 4
      %s17 = int_to_ptr.vmem [resolvable:$true] %s16
      %19 = dma.vmem_to_smem %s17, 16, [#allocation2], [#allocation3]
    $region5: #{graph_transformer_forward.1} parent=1 // pred_fallthru
      _
    // Predicated region
    $region6: #{graph_transformer_forward.1} parent=1 // pred_check
      _
    $region7: #{graph_transformer_forward.1} parent=1 // pred_check_branch
      %21 = sbr.rel (0) target = $region9
    $region8: #{graph_transformer_forward.1} parent=1 // pred_region
      _
    $region9: #{graph_transformer_forward.1} parent=1 // pred_fallthru
      _
    // Predicated region
    $region10: #{graph_transformer_forward.1} parent=1 // pred_check
      _
    $region11: #{graph_transformer_forward.1} parent=1 // pred_check_branch
      %23 = sbr.rel (0) target = $region13
    $region12: #{graph_transformer_forward.1} parent=1 // pred_region
      _
    $region13: #{graph_transformer_forward.1} parent=1 // pred_fallthru
      _
    // Predicated region
    $region14: #{graph_transformer_forward.1} parent=1 // pred_check
      _
    $region15: #{graph_transformer_forward.1} parent=1 // pred_check_branch
      %25 = sbr.rel (0) target = $region17
    $region16: #{graph_transformer_forward.1} parent=1 // pred_region
      _
    $region17: #{graph_transformer_forward.1} parent=1 // pred_fallthru
      _
    // Predicated region
    $region18: #{graph_transformer_forward.1} parent=1 // pred_check
      _
    $region19: #{graph_transformer_forward.1} parent=1 // pred_check_branch
      %27 = sbr.rel (0) target = $region21
    $region20: #{graph_transformer_forward.1} parent=1 // pred_region
      %28 = dma.done [#allocation3], 16
    $region21: #{graph_transformer_forward.1} parent=1 // pred_fallthru
      _
    %29 = sfence
    %v30 = vld [vmem:[%s1] sm:$0xff]
    %v31 = vld [vmem:[%s1 + $0x8] sm:$0xff]
    %s32 = scalar_lea.vmem %s1, 16
    %v33 = vld [vmem:[%s32] sm:$0xff]
    %v34 = vld [vmem:[%s32 + $0x8] sm:$0xff]
    %s35 = scalar_lea.vmem %s1, 32
    %v36 = vld [vmem:[%s35] sm:$0xff]
    %v37 = vld [vmem:[%s35 + $0x8] sm:$0xff]
    %s38 = scalar_lea.vmem %s1, 48
    %v39 = vld [vmem:[%s38] sm:$0xff]
    %v40 = vld [vmem:[%s38 + $0x8] sm:$0xff]
    %v41 = vlaneseq
    %v42 = vshrl.u32 %v41, 7
    %v43 = vadd.s32 %v42, 8
    %v44 = vlaneseq
    %v45 = vand.u32 %v44, 127
    %vm46 = vcmp.eq.s32.totalorder %v42, %v45
    %vm47 = vcmp.eq.s32.totalorder %v43, %v45
    %s48 = sld [smem:[#allocation2]]
    %v49 = vstv %s48
    %v50 = vmul.f32 %v49, %v30
    %v51 = vmul.f32 %v49, %v31
    %s52 = sld [smem:[#allocation2 + $0x1]]
    %v53 = vstv %s52
    %v54 = vmul.f32 %v53, %v33
    %v55 = vmul.f32 %v53, %v34
    %v56 = vadd.f32 %v50, %v54
    %v57 = vadd.f32 %v51, %v55
    %s58 = sld [smem:[#allocation2 + $0x2]]
    %v59 = vstv %s58
    %v60 = vmul.f32 %v59, %v36
    %v61 = vmul.f32 %v59, %v37
    %v62 = vadd.f32 %v56, %v60
    %v63 = vadd.f32 %v57, %v61
    %s64 = sld [smem:[#allocation2 + $0x3]]
    %v65 = vstv %s64
    %v66 = vmul.f32 %v65, %v39
    %v67 = vmul.f32 %v65, %v40
    %v68 = vadd.f32 %v62, %v66
    %v69 = vadd.f32 %v63, %v67
    %s70 = sld [smem:[#allocation2 + $0x8]]
    %v71 = vstv %s70
    %v72 = vmul.f32 %v71, %v30
    %v73 = vmul.f32 %v71, %v31
    %s74 = sld [smem:[#allocation2 + $0x9]]
    %v75 = vstv %s74
    %v76 = vmul.f32 %v75, %v33
    %v77 = vmul.f32 %v75, %v34
    %v78 = vadd.f32 %v72, %v76
    %v79 = vadd.f32 %v73, %v77
    %s80 = sld [smem:[#allocation2 + $0xa]]
    %v81 = vstv %s80
    %v82 = vmul.f32 %v81, %v36
    %v83 = vmul.f32 %v81, %v37
    %v84 = vadd.f32 %v78, %v82
    %v85 = vadd.f32 %v79, %v83
    %s86 = sld [smem:[#allocation2 + $0xb]]
    %v87 = vstv %s86
    %v88 = vmul.f32 %v87, %v39
    %v89 = vmul.f32 %v87, %v40
    %v90 = vadd.f32 %v84, %v88
    %v91 = vadd.f32 %v85, %v89
    %vm92 = vcmask 130048
    %v94 = vsel %vm92, %v68, 0
    %v97 = vsel %vm92, %v69, 0
    %99 = vmatprep.subr.mxu0 0.0
    %100 = vmatpush1.msra.mxu0 %v90
    %101 = vmatprep.subr.mxu0 0.0
    %102 = vmatpush1.msra.mxu0 %v91
    %103 = vmatprep.subr.mxu0 0.0
    %104 = vmatpush1.msra.mxu0 0.0
    %105 = vmatprep.subr.mxu0 0.0
    %106 = vmatpush1.msra.mxu0 0.0
    %107 = vmatprep.subr.mxu0 0.0
    %108 = vmatpush1.msra.mxu0 0.0
    %109 = vmatprep.subr.mxu0 0.0
    %110 = vmatpush1.msra.mxu0 0.0
    %111 = vmatprep.subr.mxu0 0.0
    %112 = vmatpush1.msra.mxu0 0.0
    %113 = vmatprep.subr.mxu0 0.0
    %114 = vmatpush1.msra.mxu0 0.0
    %115 = vmatprep.subr.mxu0 0.0
    %116 = vmatpush1.msra.mxu0 0.0
    %117 = vmatprep.subr.mxu0 0.0
    %118 = vmatpush1.msra.mxu0 0.0
    %119 = vmatprep.subr.mxu0 0.0
    %120 = vmatpush1.msra.mxu0 0.0
    %121 = vmatprep.subr.mxu0 0.0
    %122 = vmatpush1.msra.mxu0 0.0
    %123 = vmatprep.subr.mxu0 0.0
    %124 = vmatpush1.msra.mxu0 0.0
    %125 = vmatprep.subr.mxu0 0.0
    %126 = vmatpush1.msra.mxu0 0.0
    %127 = vmatprep.subr.mxu0 0.0
    %128 = vmatpush1.msra.mxu0 0.0
    %129 = vmatprep.subr.mxu0 0.0
    %130 = vmatpush1.msra.mxu0 0.0
    %131 = vmatprep.subr.mxu0 0.0
    %132 = vmatpush1.msra.mxu0 0.0
    %133 = vmatprep.subr.mxu0 0.0
    %134 = vmatpush1.msra.mxu0 0.0
    %135 = vmatprep.subr.mxu0 0.0
    %136 = vmatpush1.msra.mxu0 0.0
    %137 = vmatprep.subr.mxu0 0.0
    %138 = vmatpush1.msra.mxu0 0.0
    %139 = vmatprep.subr.mxu0 0.0
    %140 = vmatpush1.msra.mxu0 0.0
    %141 = vmatprep.subr.mxu0 0.0
    %142 = vmatpush1.msra.mxu0 0.0
    %143 = vmatprep.subr.mxu0 0.0
    %144 = vmatpush1.msra.mxu0 0.0
    %145 = vmatprep.subr.mxu0 0.0
    %146 = vmatpush1.msra.mxu0 0.0
    %147 = vmatprep.subr.mxu0 0.0
    %148 = vmatpush1.msra.mxu0 0.0
    %149 = vmatprep.subr.mxu0 0.0
    %150 = vmatpush1.msra.mxu0 0.0
    %151 = vmatprep.subr.mxu0 0.0
    %152 = vmatpush1.msra.mxu0 0.0
    %153 = vmatprep.subr.mxu0 0.0
    %154 = vmatpush1.msra.mxu0 0.0
    %155 = vmatprep.subr.mxu0 0.0
    %156 = vmatpush1.msra.mxu0 0.0
    %157 = vmatprep.subr.mxu0 0.0
    %158 = vmatpush1.msra.mxu0 0.0
    %159 = vmatprep.subr.mxu0 0.0
    %160 = vmatpush1.msra.mxu0 0.0
    %161 = vmatprep.subr.mxu0 0.0
    %162 = vmatpush1.msra.mxu0 0.0
    %163 = vmatprep.mubr.f32.mxu0 0.0
    %164 = vmatmul.mubr.f32.gmra.mrb[0].mxu0 %v94
    %v165 = vpop.f32.mrb[0].mxu0
    %v166 = vadd.f32 0.0, %v165
    %v167 = vpop.f32.mrb[0].mxu0
    %168 = vmatprep.mubr.f32.mxu0 0.0
    %169 = vmatmul.mubr.f32.gmra.mrb[0].mxu0 %v97
    %v170 = vpop.f32.mrb[0].mxu0
    %v171 = vadd.f32 0.0, %v170
    %v172 = vpop.f32.mrb[0].mxu0
    %173 = vdwg.mxu0
    %s174 = sld [smem:[#allocation2 + $0x4]]
    %v175 = vstv %s174
    %v176 = vmul.f32 %v175, %v30
    %v177 = vmul.f32 %v175, %v31
    %s178 = sld [smem:[#allocation2 + $0x5]]
    %v179 = vstv %s178
    %v180 = vmul.f32 %v179, %v33
    %v181 = vmul.f32 %v179, %v34
    %v182 = vadd.f32 %v176, %v180
    %v183 = vadd.f32 %v177, %v181
    %s184 = sld [smem:[#allocation2 + $0x6]]
    %v185 = vstv %s184
    %v186 = vmul.f32 %v185, %v36
    %v187 = vmul.f32 %v185, %v37
    %v188 = vadd.f32 %v182, %v186
    %v189 = vadd.f32 %v183, %v187
    %s190 = sld [smem:[#allocation2 + $0x7]]
    %v191 = vstv %s190
    %v192 = vmul.f32 %v191, %v39
    %v193 = vmul.f32 %v191, %v40
    %v194 = vadd.f32 %v188, %v192
    %v195 = vadd.f32 %v189, %v193
    %s196 = sld [smem:[#allocation2 + $0xc]]
    %v197 = vstv %s196
    %v198 = vmul.f32 %v197, %v30
    %v199 = vmul.f32 %v197, %v31
    %s200 = sld [smem:[#allocation2 + $0xd]]
    %v201 = vstv %s200
    %v202 = vmul.f32 %v201, %v33
    %v203 = vmul.f32 %v201, %v34
    %v204 = vadd.f32 %v198, %v202
    %v205 = vadd.f32 %v199, %v203
    %s206 = sld [smem:[#allocation2 + $0xe]]
    %v207 = vstv %s206
    %v208 = vmul.f32 %v207, %v36
    %v209 = vmul.f32 %v207, %v37
    %v210 = vadd.f32 %v204, %v208
    %v211 = vadd.f32 %v205, %v209
    %s212 = sld [smem:[#allocation2 + $0xf]]
    %v213 = vstv %s212
    %v214 = vmul.f32 %v213, %v39
    %v215 = vmul.f32 %v213, %v40
    %v216 = vadd.f32 %v210, %v214
    %v217 = vadd.f32 %v211, %v215
    %v219 = vsel %vm92, %v194, 0
    %v222 = vsel %vm92, %v195, 0
    %224 = vmatprep.subr.mxu0 0.0
    %225 = vmatpush1.msra.mxu0 %v216
    %226 = vmatprep.subr.mxu0 0.0
    %227 = vmatpush1.msra.mxu0 %v217
    %228 = vmatprep.subr.mxu0 0.0
    %229 = vmatpush1.msra.mxu0 0.0
    %230 = vmatprep.subr.mxu0 0.0
    %231 = vmatpush1.msra.mxu0 0.0
    %232 = vmatprep.subr.mxu0 0.0
    %233 = vmatpush1.msra.mxu0 0.0
    %234 = vmatprep.subr.mxu0 0.0
    %235 = vmatpush1.msra.mxu0 0.0
    %236 = vmatprep.subr.mxu0 0.0
    %237 = vmatpush1.msra.mxu0 0.0
    %238 = vmatprep.subr.mxu0 0.0
    %239 = vmatpush1.msra.mxu0 0.0
    %240 = vmatprep.subr.mxu0 0.0
    %241 = vmatpush1.msra.mxu0 0.0
    %242 = vmatprep.subr.mxu0 0.0
    %243 = vmatpush1.msra.mxu0 0.0
    %244 = vmatprep.subr.mxu0 0.0
    %245 = vmatpush1.msra.mxu0 0.0
    %246 = vmatprep.subr.mxu0 0.0
    %247 = vmatpush1.msra.mxu0 0.0
    %248 = vmatprep.subr.mxu0 0.0
    %249 = vmatpush1.msra.mxu0 0.0
    %250 = vmatprep.subr.mxu0 0.0
    %251 = vmatpush1.msra.mxu0 0.0
    %252 = vmatprep.subr.mxu0 0.0
    %253 = vmatpush1.msra.mxu0 0.0
    %254 = vmatprep.subr.mxu0 0.0
    %255 = vmatpush1.msra.mxu0 0.0
    %256 = vmatprep.subr.mxu0 0.0
    %257 = vmatpush1.msra.mxu0 0.0
    %258 = vmatprep.subr.mxu0 0.0
    %259 = vmatpush1.msra.mxu0 0.0
    %260 = vmatprep.subr.mxu0 0.0
    %261 = vmatpush1.msra.mxu0 0.0
    %262 = vmatprep.subr.mxu0 0.0
    %263 = vmatpush1.msra.mxu0 0.0
    %264 = vmatprep.subr.mxu0 0.0
    %265 = vmatpush1.msra.mxu0 0.0
    %266 = vmatprep.subr.mxu0 0.0
    %267 = vmatpush1.msra.mxu0 0.0
    %268 = vmatprep.subr.mxu0 0.0
    %269 = vmatpush1.msra.mxu0 0.0
    %270 = vmatprep.subr.mxu0 0.0
    %271 = vmatpush1.msra.mxu0 0.0
    %272 = vmatprep.subr.mxu0 0.0
    %273 = vmatpush1.msra.mxu0 0.0
    %274 = vmatprep.subr.mxu0 0.0
    %275 = vmatpush1.msra.mxu0 0.0
    %276 = vmatprep.subr.mxu0 0.0
    %277 = vmatpush1.msra.mxu0 0.0
    %278 = vmatprep.subr.mxu0 0.0
    %279 = vmatpush1.msra.mxu0 0.0
    %280 = vmatprep.subr.mxu0 0.0
    %281 = vmatpush1.msra.mxu0 0.0
    %282 = vmatprep.subr.mxu0 0.0
    %283 = vmatpush1.msra.mxu0 0.0
    %284 = vmatprep.subr.mxu0 0.0
    %285 = vmatpush1.msra.mxu0 0.0
    %286 = vmatprep.subr.mxu0 0.0
    %287 = vmatpush1.msra.mxu0 0.0
    %288 = vmatprep.mubr.f32.mxu0 0.0
    %289 = vmatmul.mubr.f32.gmra.mrb[0].mxu0 %v219
    %v290 = vpop.f32.mrb[0].mxu0
    %v291 = vadd.f32 0.0, %v290
    %v292 = vpop.f32.mrb[0].mxu0
    %293 = vmatprep.mubr.f32.mxu0 0.0
    %294 = vmatmul.mubr.f32.gmra.mrb[0].mxu0 %v222
    %v295 = vpop.f32.mrb[0].mxu0
    %v296 = vadd.f32 0.0, %v295
    %v297 = vpop.f32.mrb[0].mxu0
    %298 = vdwg.mxu0
    %s299 = sld [smem:[#allocation2 + $0x10]]
    %v300 = vstv %s299
    %v301 = vmul.f32 %v300, %v30
    %v302 = vmul.f32 %v300, %v31
    %s303 = sld [smem:[#allocation2 + $0x11]]
    %v304 = vstv %s303
    %v305 = vmul.f32 %v304, %v33
    %v306 = vmul.f32 %v304, %v34
    %v307 = vadd.f32 %v301, %v305
    %v308 = vadd.f32 %v302, %v306
    %s309 = sld [smem:[#allocation2 + $0x12]]
    %v310 = vstv %s309
    %v311 = vmul.f32 %v310, %v36
    %v312 = vmul.f32 %v310, %v37
    %v313 = vadd.f32 %v307, %v311
    %v314 = vadd.f32 %v308, %v312
    %s315 = sld [smem:[#allocation2 + $0x13]]
    %v316 = vstv %s315
    %v317 = vmul.f32 %v316, %v39
    %v318 = vmul.f32 %v316, %v40
    %v319 = vadd.f32 %v313, %v317
    %v320 = vadd.f32 %v314, %v318
    %v321 = vsel %vm46, 0.0, %v166
    %v322 = vsel %vm47, 0.0, %v171
    %v323 = vsel %vm92, %v321, 0.0
    %v324 = vsel %vm92, %v322, 0.0
    %v325 = vadd.f32 %v323, %v324
    %v326 = vrot.slane %v325, 4
    %v327 = vadd.f32 %v325, %v326
    %v328 = vrot.slane %v327, 2
    %v329 = vadd.f32 %v327, %v328
    %v330 = vrot.slane %v329, 1
    %v331 = vadd.f32 %v329, %v330
    %vm332 = vcmp.eq.f32.partialorder %v331, 0.0
    %v333 = vrcp.pop %v331
    %v334 = vmul.f32 1.0, %v333
    %v335 = vsel %vm332, 0.0, %v334
    %v336 = vmul.f32 %v321, %v335
    %v337 = vmul.f32 %v322, %v335
    %v339 = vsel %vm92, %v336, 0
    %v342 = vsel %vm92, %v337, 0
    %344 = vmatprep.subr.mxu0 0.0
    %345 = vmatpush1.msra.mxu0 %v319
    %346 = vmatprep.subr.mxu0 0.0
    %347 = vmatpush1.msra.mxu0 %v320
    %348 = vmatprep.subr.mxu0 0.0
    %349 = vmatpush1.msra.mxu0 0.0
    %350 = vmatprep.subr.mxu0 0.0
    %351 = vmatpush1.msra.mxu0 0.0
    %352 = vmatprep.subr.mxu0 0.0
    %353 = vmatpush1.msra.mxu0 0.0
    %354 = vmatprep.subr.mxu0 0.0
    %355 = vmatpush1.msra.mxu0 0.0
    %356 = vmatprep.subr.mxu0 0.0
    %357 = vmatpush1.msra.mxu0 0.0
    %358 = vmatprep.subr.mxu0 0.0
    %359 = vmatpush1.msra.mxu0 0.0
    %360 = vmatprep.subr.mxu0 0.0
    %361 = vmatpush1.msra.mxu0 0.0
    %362 = vmatprep.subr.mxu0 0.0
    %363 = vmatpush1.msra.mxu0 0.0
    %364 = vmatprep.subr.mxu0 0.0
    %365 = vmatpush1.msra.mxu0 0.0
    %366 = vmatprep.subr.mxu0 0.0
    %367 = vmatpush1.msra.mxu0 0.0
    %368 = vmatprep.subr.mxu0 0.0
    %369 = vmatpush1.msra.mxu0 0.0
    %370 = vmatprep.subr.mxu0 0.0
    %371 = vmatpush1.msra.mxu0 0.0
    %372 = vmatprep.subr.mxu0 0.0
    %373 = vmatpush1.msra.mxu0 0.0
    %374 = vmatprep.subr.mxu0 0.0
    %375 = vmatpush1.msra.mxu0 0.0
    %376 = vmatprep.subr.mxu0 0.0
    %377 = vmatpush1.msra.mxu0 0.0
    %378 = vmatprep.subr.mxu0 0.0
    %379 = vmatpush1.msra.mxu0 0.0
    %380 = vmatprep.subr.mxu0 0.0
    %381 = vmatpush1.msra.mxu0 0.0
    %382 = vmatprep.subr.mxu0 0.0
    %383 = vmatpush1.msra.mxu0 0.0
    %384 = vmatprep.subr.mxu0 0.0
    %385 = vmatpush1.msra.mxu0 0.0
    %386 = vmatprep.subr.mxu0 0.0
    %387 = vmatpush1.msra.mxu0 0.0
    %388 = vmatprep.subr.mxu0 0.0
    %389 = vmatpush1.msra.mxu0 0.0
    %390 = vmatprep.subr.mxu0 0.0
    %391 = vmatpush1.msra.mxu0 0.0
    %392 = vmatprep.subr.mxu0 0.0
    %393 = vmatpush1.msra.mxu0 0.0
    %394 = vmatprep.subr.mxu0 0.0
    %395 = vmatpush1.msra.mxu0 0.0
    %396 = vmatprep.subr.mxu0 0.0
    %397 = vmatpush1.msra.mxu0 0.0
    %398 = vmatprep.subr.mxu0 0.0
    %399 = vmatpush1.msra.mxu0 0.0
    %400 = vmatprep.subr.mxu0 0.0
    %401 = vmatpush1.msra.mxu0 0.0
    %402 = vmatprep.subr.mxu0 0.0
    %403 = vmatpush1.msra.mxu0 0.0
    %404 = vmatprep.subr.mxu0 0.0
    %405 = vmatpush1.msra.mxu0 0.0
    %406 = vmatprep.subr.mxu0 0.0
    %407 = vmatpush1.msra.mxu0 0.0
    %408 = vmatprep.mubr.f32.mxu0 0.0
    %409 = vmatmul.mubr.f32.gmra.mrb[0].mxu0 %v339
    %v410 = vpop.f32.mrb[0].mxu0
    %v411 = vadd.f32 0.0, %v410
    %v412 = vpop.f32.mrb[0].mxu0
    %413 = vmatprep.mubr.f32.mxu0 0.0
    %414 = vmatmul.mubr.f32.gmra.mrb[0].mxu0 %v342
    %v415 = vpop.f32.mrb[0].mxu0
    %v416 = vadd.f32 0.0, %v415
    %v417 = vpop.f32.mrb[0].mxu0
    %418 = vdwg.mxu0
    %s419 = sld [smem:[#allocation2 + $0x14]]
    %v420 = vstv %s419
    %v421 = vmul.f32 %v420, %v30
    %v422 = vmul.f32 %v420, %v31
    %s423 = sld [smem:[#allocation2 + $0x15]]
    %v424 = vstv %s423
    %v425 = vmul.f32 %v424, %v33
    %v426 = vmul.f32 %v424, %v34
    %v427 = vadd.f32 %v421, %v425
    %v428 = vadd.f32 %v422, %v426
    %s429 = sld [smem:[#allocation2 + $0x16]]
    %v430 = vstv %s429
    %v431 = vmul.f32 %v430, %v36
    %v432 = vmul.f32 %v430, %v37
    %v433 = vadd.f32 %v427, %v431
    %v434 = vadd.f32 %v428, %v432
    %s435 = sld [smem:[#allocation2 + $0x17]]
    %v436 = vstv %s435
    %v437 = vmul.f32 %v436, %v39
    %v438 = vmul.f32 %v436, %v40
    %v439 = vadd.f32 %v433, %v437
    %v440 = vadd.f32 %v434, %v438
    %v441 = vsel %vm46, 0.0, %v291
    %v442 = vsel %vm47, 0.0, %v296
    %v443 = vsel %vm92, %v441, 0.0
    %v444 = vsel %vm92, %v442, 0.0
    %v445 = vadd.f32 %v443, %v444
    %v446 = vrot.slane %v445, 4
    %v447 = vadd.f32 %v445, %v446
    %v448 = vrot.slane %v447, 2
    %v449 = vadd.f32 %v447, %v448
    %v450 = vrot.slane %v449, 1
    %v451 = vadd.f32 %v449, %v450
    %vm452 = vcmp.eq.f32.partialorder %v451, 0.0
    %v453 = vrcp.pop %v451
    %v454 = vmul.f32 1.0, %v453
    %v455 = vsel %vm452, 0.0, %v454
    %v456 = vmul.f32 %v441, %v455
    %v457 = vmul.f32 %v442, %v455
    %v459 = vsel %vm92, %v456, 0
    %v462 = vsel %vm92, %v457, 0
    %464 = vmatprep.subr.mxu0 0.0
    %465 = vmatpush1.msra.mxu0 %v439
    %466 = vmatprep.subr.mxu0 0.0
    %467 = vmatpush1.msra.mxu0 %v440
    %468 = vmatprep.subr.mxu0 0.0
    %469 = vmatpush1.msra.mxu0 0.0
    %470 = vmatprep.subr.mxu0 0.0
    %471 = vmatpush1.msra.mxu0 0.0
    %472 = vmatprep.subr.mxu0 0.0
    %473 = vmatpush1.msra.mxu0 0.0
    %474 = vmatprep.subr.mxu0 0.0
    %475 = vmatpush1.msra.mxu0 0.0
    %476 = vmatprep.subr.mxu0 0.0
    %477 = vmatpush1.msra.mxu0 0.0
    %478 = vmatprep.subr.mxu0 0.0
    %479 = vmatpush1.msra.mxu0 0.0
    %480 = vmatprep.subr.mxu0 0.0
    %481 = vmatpush1.msra.mxu0 0.0
    %482 = vmatprep.subr.mxu0 0.0
    %483 = vmatpush1.msra.mxu0 0.0
    %484 = vmatprep.subr.mxu0 0.0
    %485 = vmatpush1.msra.mxu0 0.0
    %486 = vmatprep.subr.mxu0 0.0
    %487 = vmatpush1.msra.mxu0 0.0
    %488 = vmatprep.subr.mxu0 0.0
    %489 = vmatpush1.msra.mxu0 0.0
    %490 = vmatprep.subr.mxu0 0.0
    %491 = vmatpush1.msra.mxu0 0.0
    %492 = vmatprep.subr.mxu0 0.0
    %493 = vmatpush1.msra.mxu0 0.0
    %494 = vmatprep.subr.mxu0 0.0
    %495 = vmatpush1.msra.mxu0 0.0
    %496 = vmatprep.subr.mxu0 0.0
    %497 = vmatpush1.msra.mxu0 0.0
    %498 = vmatprep.subr.mxu0 0.0
    %499 = vmatpush1.msra.mxu0 0.0
    %500 = vmatprep.subr.mxu0 0.0
    %501 = vmatpush1.msra.mxu0 0.0
    %502 = vmatprep.subr.mxu0 0.0
    %503 = vmatpush1.msra.mxu0 0.0
    %504 = vmatprep.subr.mxu0 0.0
    %505 = vmatpush1.msra.mxu0 0.0
    %506 = vmatprep.subr.mxu0 0.0
    %507 = vmatpush1.msra.mxu0 0.0
    %508 = vmatprep.subr.mxu0 0.0
    %509 = vmatpush1.msra.mxu0 0.0
    %510 = vmatprep.subr.mxu0 0.0
    %511 = vmatpush1.msra.mxu0 0.0
    %512 = vmatprep.subr.mxu0 0.0
    %513 = vmatpush1.msra.mxu0 0.0
    %514 = vmatprep.subr.mxu0 0.0
    %515 = vmatpush1.msra.mxu0 0.0
    %516 = vmatprep.subr.mxu0 0.0
    %517 = vmatpush1.msra.mxu0 0.0
    %518 = vmatprep.subr.mxu0 0.0
    %519 = vmatpush1.msra.mxu0 0.0
    %520 = vmatprep.subr.mxu0 0.0
    %521 = vmatpush1.msra.mxu0 0.0
    %522 = vmatprep.subr.mxu0 0.0
    %523 = vmatpush1.msra.mxu0 0.0
    %524 = vmatprep.subr.mxu0 0.0
    %525 = vmatpush1.msra.mxu0 0.0
    %526 = vmatprep.subr.mxu0 0.0
    %527 = vmatpush1.msra.mxu0 0.0
    %528 = vmatprep.mubr.f32.mxu0 0.0
    %529 = vmatmul.mubr.f32.gmra.mrb[0].mxu0 %v459
    %v530 = vpop.f32.mrb[0].mxu0
    %v531 = vadd.f32 0.0, %v530
    %v532 = vpop.f32.mrb[0].mxu0
    %533 = vmatprep.mubr.f32.mxu0 0.0
    %534 = vmatmul.mubr.f32.gmra.mrb[0].mxu0 %v462
    %v535 = vpop.f32.mrb[0].mxu0
    %v536 = vadd.f32 0.0, %v535
    %v537 = vpop.f32.mrb[0].mxu0
    %538 = vdwg.mxu0
    %v539 = vld [vmem:[%s2] sm:$0xff]
    %v540 = vld [vmem:[%s2 + $0x8] sm:$0xff]
    %v541 = vld [vmem:[%s3] sm:$0xff]
    %vm542 = vcmask 64512
    %v544 = vsel %vm542, %v539, 0
    %v547 = vsel %vm542, %v540, 0
    %549 = vmatprep.subr.mxu0 0.0
    %550 = vmatpush1.msra.mxu0 %v541
    %551 = vmatprep.subr.mxu0 0.0
    %552 = vmatpush1.msra.mxu0 0.0
    %553 = vmatprep.subr.mxu0 0.0
    %554 = vmatpush1.msra.mxu0 0.0
    %555 = vmatprep.subr.mxu0 0.0
    %556 = vmatpush1.msra.mxu0 0.0
    %557 = vmatprep.subr.mxu0 0.0
    %558 = vmatpush1.msra.mxu0 0.0
    %559 = vmatprep.subr.mxu0 0.0
    %560 = vmatpush1.msra.mxu0 0.0
    %561 = vmatprep.subr.mxu0 0.0
    %562 = vmatpush1.msra.mxu0 0.0
    %563 = vmatprep.subr.mxu0 0.0
    %564 = vmatpush1.msra.mxu0 0.0
    %565 = vmatprep.subr.mxu0 0.0
    %566 = vmatpush1.msra.mxu0 0.0
    %567 = vmatprep.subr.mxu0 0.0
    %568 = vmatpush1.msra.mxu0 0.0
    %569 = vmatprep.subr.mxu0 0.0
    %570 = vmatpush1.msra.mxu0 0.0
    %571 = vmatprep.subr.mxu0 0.0
    %572 = vmatpush1.msra.mxu0 0.0
    %573 = vmatprep.subr.mxu0 0.0
    %574 = vmatpush1.msra.mxu0 0.0
    %575 = vmatprep.subr.mxu0 0.0
    %576 = vmatpush1.msra.mxu0 0.0
    %577 = vmatprep.subr.mxu0 0.0
    %578 = vmatpush1.msra.mxu0 0.0
    %579 = vmatprep.subr.mxu0 0.0
    %580 = vmatpush1.msra.mxu0 0.0
    %581 = vmatprep.subr.mxu0 0.0
    %582 = vmatpush1.msra.mxu0 0.0
    %583 = vmatprep.subr.mxu0 0.0
    %584 = vmatpush1.msra.mxu0 0.0
    %585 = vmatprep.subr.mxu0 0.0
    %586 = vmatpush1.msra.mxu0 0.0
    %587 = vmatprep.subr.mxu0 0.0
    %588 = vmatpush1.msra.mxu0 0.0
    %589 = vmatprep.subr.mxu0 0.0
    %590 = vmatpush1.msra.mxu0 0.0
    %591 = vmatprep.subr.mxu0 0.0
    %592 = vmatpush1.msra.mxu0 0.0
    %593 = vmatprep.subr.mxu0 0.0
    %594 = vmatpush1.msra.mxu0 0.0
    %595 = vmatprep.subr.mxu0 0.0
    %596 = vmatpush1.msra.mxu0 0.0
    %597 = vmatprep.subr.mxu0 0.0
    %598 = vmatpush1.msra.mxu0 0.0
    %599 = vmatprep.subr.mxu0 0.0
    %600 = vmatpush1.msra.mxu0 0.0
    %601 = vmatprep.subr.mxu0 0.0
    %602 = vmatpush1.msra.mxu0 0.0
    %603 = vmatprep.subr.mxu0 0.0
    %604 = vmatpush1.msra.mxu0 0.0
    %605 = vmatprep.subr.mxu0 0.0
    %606 = vmatpush1.msra.mxu0 0.0
    %607 = vmatprep.subr.mxu0 0.0
    %608 = vmatpush1.msra.mxu0 0.0
    %609 = vmatprep.subr.mxu0 0.0
    %610 = vmatpush1.msra.mxu0 0.0
    %611 = vmatprep.subr.mxu0 0.0
    %612 = vmatpush1.msra.mxu0 0.0
    %613 = vmatprep.mubr.f32.mxu0 0.0
    %614 = vmatmul.mubr.f32.gmra.mrb[0].mxu0 %v544
    %v615 = vpop.f32.mrb[0].mxu0
    %v616 = vadd.f32 0.0, %v615
    %v617 = vpop.f32.mrb[0].mxu0
    %618 = vmatprep.mubr.f32.mxu0 0.0
    %619 = vmatmul.mubr.f32.gmra.mrb[0].mxu0 %v547
    %v620 = vpop.f32.mrb[0].mxu0
    %v621 = vadd.f32 0.0, %v620
    %v622 = vpop.f32.mrb[0].mxu0
    %623 = vdwg.mxu0
    %v624 = vsel %vm46, 1.0, %v411
    %v625 = vsel %vm47, 1.0, %v416
    %v626 = vsel %vm92, %v624, 0.0
    %v627 = vsel %vm92, %v625, 0.0
    %v628 = vadd.f32 %v626, %v627
    %v629 = vrot.slane %v628, 4
    %v630 = vadd.f32 %v628, %v629
    %v631 = vrot.slane %v630, 2
    %v632 = vadd.f32 %v630, %v631
    %v633 = vrot.slane %v632, 1
    %v634 = vadd.f32 %v632, %v633
    %vm635 = vcmp.eq.f32.partialorder %v634, 0.0
    %v636 = vrcp.pop %v634
    %v637 = vmul.f32 1.0, %v636
    %v638 = vsel %vm635, 0.0, %v637
    %v639 = vmul.f32 %v624, %v638
    %v640 = vmul.f32 %v625, %v638
    %641 = vxpose.xlu0.b32.start [1/16] %v639, 128
    %642 = vxpose.xlu0.b32.cont [2/16] %v640, 128
    %643 = vxpose.xlu0.b32.cont [3/16] 0.0, 128
    %644 = vxpose.xlu0.b32.cont [4/16] 0.0, 128
    %645 = vxpose.xlu0.b32.cont [5/16] 0.0, 128
    %646 = vxpose.xlu0.b32.cont [6/16] 0.0, 128
    %647 = vxpose.xlu0.b32.cont [7/16] 0.0, 128
    %648 = vxpose.xlu0.b32.cont [8/16] 0.0, 128
    %649 = vxpose.xlu0.b32.cont [9/16] 0.0, 128
    %650 = vxpose.xlu0.b32.cont [10/16] 0.0, 128
    %651 = vxpose.xlu0.b32.cont [11/16] 0.0, 128
    %652 = vxpose.xlu0.b32.cont [12/16] 0.0, 128
    %653 = vxpose.xlu0.b32.cont [13/16] 0.0, 128
    %654 = vxpose.xlu0.b32.cont [14/16] 0.0, 128
    %655 = vxpose.xlu0.b32.cont [15/16] 0.0, 128
    %656 = vxpose.xlu0.b32.end [16/16] 0.0, 128
    %v657 = vpop.trf.xlu0
    %v658 = vpop.trf.xlu0
    %v659 = vpop.trf.xlu0
    %v660 = vpop.trf.xlu0
    %v661 = vpop.trf.xlu0
    %v662 = vpop.trf.xlu0
    %v663 = vpop.trf.xlu0
    %v664 = vpop.trf.xlu0
    %v665 = vpop.trf.xlu0
    %v666 = vpop.trf.xlu0
    %v667 = vpop.trf.xlu0
    %v668 = vpop.trf.xlu0
    %v669 = vpop.trf.xlu0
    %v670 = vpop.trf.xlu0
    %v671 = vpop.trf.xlu0
    %v672 = vpop.trf.xlu0
    %v674 = vsel %vm92, %v657, 0
    %v677 = vsel %vm92, %v658, 0
    %679 = vmatprep.subr.mxu0 0.0
    %680 = vmatpush1.msra.mxu0 %v616
    %681 = vmatprep.subr.mxu0 0.0
    %682 = vmatpush1.msra.mxu0 %v621
    %683 = vmatprep.subr.mxu0 0.0
    %684 = vmatpush1.msra.mxu0 0.0
    %685 = vmatprep.subr.mxu0 0.0
    %686 = vmatpush1.msra.mxu0 0.0
    %687 = vmatprep.subr.mxu0 0.0
    %688 = vmatpush1.msra.mxu0 0.0
    %689 = vmatprep.subr.mxu0 0.0
    %690 = vmatpush1.msra.mxu0 0.0
    %691 = vmatprep.subr.mxu0 0.0
    %692 = vmatpush1.msra.mxu0 0.0
    %693 = vmatprep.subr.mxu0 0.0
    %694 = vmatpush1.msra.mxu0 0.0
    %695 = vmatprep.subr.mxu0 0.0
    %696 = vmatpush1.msra.mxu0 0.0
    %697 = vmatprep.subr.mxu0 0.0
    %698 = vmatpush1.msra.mxu0 0.0
    %699 = vmatprep.subr.mxu0 0.0
    %700 = vmatpush1.msra.mxu0 0.0
    %701 = vmatprep.subr.mxu0 0.0
    %702 = vmatpush1.msra.mxu0 0.0
    %703 = vmatprep.subr.mxu0 0.0
    %704 = vmatpush1.msra.mxu0 0.0
    %705 = vmatprep.subr.mxu0 0.0
    %706 = vmatpush1.msra.mxu0 0.0
    %707 = vmatprep.subr.mxu0 0.0
    %708 = vmatpush1.msra.mxu0 0.0
    %709 = vmatprep.subr.mxu0 0.0
    %710 = vmatpush1.msra.mxu0 0.0
    %711 = vmatprep.subr.mxu0 0.0
    %712 = vmatpush1.msra.mxu0 0.0
    %713 = vmatprep.subr.mxu0 0.0
    %714 = vmatpush1.msra.mxu0 0.0
    %715 = vmatprep.subr.mxu0 0.0
    %716 = vmatpush1.msra.mxu0 0.0
    %717 = vmatprep.subr.mxu0 0.0
    %718 = vmatpush1.msra.mxu0 0.0
    %719 = vmatprep.subr.mxu0 0.0
    %720 = vmatpush1.msra.mxu0 0.0
    %721 = vmatprep.subr.mxu0 0.0
    %722 = vmatpush1.msra.mxu0 0.0
    %723 = vmatprep.subr.mxu0 0.0
    %724 = vmatpush1.msra.mxu0 0.0
    %725 = vmatprep.subr.mxu0 0.0
    %726 = vmatpush1.msra.mxu0 0.0
    %727 = vmatprep.subr.mxu0 0.0
    %728 = vmatpush1.msra.mxu0 0.0
    %729 = vmatprep.subr.mxu0 0.0
    %730 = vmatpush1.msra.mxu0 0.0
    %731 = vmatprep.subr.mxu0 0.0
    %732 = vmatpush1.msra.mxu0 0.0
    %733 = vmatprep.subr.mxu0 0.0
    %734 = vmatpush1.msra.mxu0 0.0
    %735 = vmatprep.subr.mxu0 0.0
    %736 = vmatpush1.msra.mxu0 0.0
    %737 = vmatprep.subr.mxu0 0.0
    %738 = vmatpush1.msra.mxu0 0.0
    %739 = vmatprep.subr.mxu0 0.0
    %740 = vmatpush1.msra.mxu0 0.0
    %741 = vmatprep.subr.mxu0 0.0
    %742 = vmatpush1.msra.mxu0 0.0
    %743 = vmatprep.mubr.f32.mxu0 0.0
    %744 = vmatmul.mubr.f32.gmra.mrb[0].mxu0 %v674
    %v745 = vpop.f32.mrb[0].mxu0
    %v746 = vadd.f32 0.0, %v745
    %v747 = vpop.f32.mrb[0].mxu0
    %748 = vmatprep.mubr.f32.mxu0 0.0
    %749 = vmatmul.mubr.f32.gmra.mrb[0].mxu0 %v677
    %v750 = vpop.f32.mrb[0].mxu0
    %v751 = vadd.f32 0.0, %v750
    %v752 = vpop.f32.mrb[0].mxu0
    %753 = vdwg.mxu0
    %v754 = vmax.f32 %v746, 0.0
    %v755 = vmax.f32 %v751, 0.0
    %v756 = vsel %vm46, 1.0, %v531
    %v757 = vsel %vm47, 1.0, %v536
    %v758 = vsel %vm92, %v756, 0.0
    %v759 = vsel %vm92, %v757, 0.0
    %v760 = vadd.f32 %v758, %v759
    %v761 = vrot.slane %v760, 4
    %v762 = vadd.f32 %v760, %v761
    %v763 = vrot.slane %v762, 2
    %v764 = vadd.f32 %v762, %v763
    %v765 = vrot.slane %v764, 1
    %v766 = vadd.f32 %v764, %v765
    %vm767 = vcmp.eq.f32.partialorder %v766, 0.0
    %v768 = vrcp.pop %v766
    %v769 = vmul.f32 1.0, %v768
    %v770 = vsel %vm767, 0.0, %v769
    %v771 = vmul.f32 %v756, %v770
    %v772 = vmul.f32 %v757, %v770
    %773 = vxpose.xlu0.b32.start [1/16] %v771, 128
    %774 = vxpose.xlu0.b32.cont [2/16] %v772, 128
    %775 = vxpose.xlu0.b32.cont [3/16] 0.0, 128
    %776 = vxpose.xlu0.b32.cont [4/16] 0.0, 128
    %777 = vxpose.xlu0.b32.cont [5/16] 0.0, 128
    %778 = vxpose.xlu0.b32.cont [6/16] 0.0, 128
    %779 = vxpose.xlu0.b32.cont [7/16] 0.0, 128
    %780 = vxpose.xlu0.b32.cont [8/16] 0.0, 128
    %781 = vxpose.xlu0.b32.cont [9/16] 0.0, 128
    %782 = vxpose.xlu0.b32.cont [10/16] 0.0, 128
    %783 = vxpose.xlu0.b32.cont [11/16] 0.0, 128
    %784 = vxpose.xlu0.b32.cont [12/16] 0.0, 128
    %785 = vxpose.xlu0.b32.cont [13/16] 0.0, 128
    %786 = vxpose.xlu0.b32.cont [14/16] 0.0, 128
    %787 = vxpose.xlu0.b32.cont [15/16] 0.0, 128
    %788 = vxpose.xlu0.b32.end [16/16] 0.0, 128
    %v789 = vpop.trf.xlu0
    %v790 = vpop.trf.xlu0
    %v791 = vpop.trf.xlu0
    %v792 = vpop.trf.xlu0
    %v793 = vpop.trf.xlu0
    %v794 = vpop.trf.xlu0
    %v795 = vpop.trf.xlu0
    %v796 = vpop.trf.xlu0
    %v797 = vpop.trf.xlu0
    %v798 = vpop.trf.xlu0
    %v799 = vpop.trf.xlu0
    %v800 = vpop.trf.xlu0
    %v801 = vpop.trf.xlu0
    %v802 = vpop.trf.xlu0
    %v803 = vpop.trf.xlu0
    %v804 = vpop.trf.xlu0
    %v806 = vsel %vm92, %v789, 0
    %v809 = vsel %vm92, %v790, 0
    %811 = vmatprep.subr.mxu0 0.0
    %812 = vmatpush1.msra.mxu0 %v616
    %813 = vmatprep.subr.mxu0 0.0
    %814 = vmatpush1.msra.mxu0 %v621
    %815 = vmatprep.subr.mxu0 0.0
    %816 = vmatpush1.msra.mxu0 0.0
    %817 = vmatprep.subr.mxu0 0.0
    %818 = vmatpush1.msra.mxu0 0.0
    %819 = vmatprep.subr.mxu0 0.0
    %820 = vmatpush1.msra.mxu0 0.0
    %821 = vmatprep.subr.mxu0 0.0
    %822 = vmatpush1.msra.mxu0 0.0
    %823 = vmatprep.subr.mxu0 0.0
    %824 = vmatpush1.msra.mxu0 0.0
    %825 = vmatprep.subr.mxu0 0.0
    %826 = vmatpush1.msra.mxu0 0.0
    %827 = vmatprep.subr.mxu0 0.0
    %828 = vmatpush1.msra.mxu0 0.0
    %829 = vmatprep.subr.mxu0 0.0
    %830 = vmatpush1.msra.mxu0 0.0
    %831 = vmatprep.subr.mxu0 0.0
    %832 = vmatpush1.msra.mxu0 0.0
    %833 = vmatprep.subr.mxu0 0.0
    %834 = vmatpush1.msra.mxu0 0.0
    %835 = vmatprep.subr.mxu0 0.0
    %836 = vmatpush1.msra.mxu0 0.0
    %837 = vmatprep.subr.mxu0 0.0
    %838 = vmatpush1.msra.mxu0 0.0
    %839 = vmatprep.subr.mxu0 0.0
    %840 = vmatpush1.msra.mxu0 0.0
    %841 = vmatprep.subr.mxu0 0.0
    %842 = vmatpush1.msra.mxu0 0.0
    %843 = vmatprep.subr.mxu0 0.0
    %844 = vmatpush1.msra.mxu0 0.0
    %845 = vmatprep.subr.mxu0 0.0
    %846 = vmatpush1.msra.mxu0 0.0
    %847 = vmatprep.subr.mxu0 0.0
    %848 = vmatpush1.msra.mxu0 0.0
    %849 = vmatprep.subr.mxu0 0.0
    %850 = vmatpush1.msra.mxu0 0.0
    %851 = vmatprep.subr.mxu0 0.0
    %852 = vmatpush1.msra.mxu0 0.0
    %853 = vmatprep.subr.mxu0 0.0
    %854 = vmatpush1.msra.mxu0 0.0
    %855 = vmatprep.subr.mxu0 0.0
    %856 = vmatpush1.msra.mxu0 0.0
    %857 = vmatprep.subr.mxu0 0.0
    %858 = vmatpush1.msra.mxu0 0.0
    %859 = vmatprep.subr.mxu0 0.0
    %860 = vmatpush1.msra.mxu0 0.0
    %861 = vmatprep.subr.mxu0 0.0
    %862 = vmatpush1.msra.mxu0 0.0
    %863 = vmatprep.subr.mxu0 0.0
    %864 = vmatpush1.msra.mxu0 0.0
    %865 = vmatprep.subr.mxu0 0.0
    %866 = vmatpush1.msra.mxu0 0.0
    %867 = vmatprep.subr.mxu0 0.0
    %868 = vmatpush1.msra.mxu0 0.0
    %869 = vmatprep.subr.mxu0 0.0
    %870 = vmatpush1.msra.mxu0 0.0
    %871 = vmatprep.subr.mxu0 0.0
    %872 = vmatpush1.msra.mxu0 0.0
    %873 = vmatprep.subr.mxu0 0.0
    %874 = vmatpush1.msra.mxu0 0.0
    %875 = vmatprep.mubr.f32.mxu0 0.0
    %876 = vmatmul.mubr.f32.gmra.mrb[0].mxu0 %v806
    %v877 = vpop.f32.mrb[0].mxu0
    %v878 = vadd.f32 0.0, %v877
    %v879 = vpop.f32.mrb[0].mxu0
    %880 = vmatprep.mubr.f32.mxu0 0.0
    %881 = vmatmul.mubr.f32.gmra.mrb[0].mxu0 %v809
    %v882 = vpop.f32.mrb[0].mxu0
    %v883 = vadd.f32 0.0, %v882
    %v884 = vpop.f32.mrb[0].mxu0
    %885 = vdwg.mxu0
    %v886 = vmax.f32 %v878, 0.0
    %v887 = vmax.f32 %v883, 0.0
    %890 = vrot.lane.b32.xlu0 %v886, 16
    %v891 = vpop.permute.xlu0 %890
    %892 = vrot.lane.b32.xlu0 %v887, 16
    %v893 = vpop.permute.xlu0 %892
    %v896 = vsel %vm92, %v754, %v891
    %v897 = vsel %vm92, %v755, %v893
    %v898 = vld [vmem:[%s3 + $0x8] sm:$0xff]
    %v899 = vld [vmem:[%s3 + $0x10] sm:$0xff]
    %v900 = vld [vmem:[%s3 + $0x18] sm:$0xff]
    %v901 = vld [vmem:[%s3 + $0x20] sm:$0xff]
    %v902 = vld [vmem:[%s3 + $0x28] sm:$0xff]
    %v903 = vlaneseq
    %v904 = vshrl.u32 %v903, 7
    %v905 = vsub.s32 0, %v904
    %v906 = vrot.slane %v902, %v905
    %vm907 = vcmask 261120
    %v909 = vsel %vm907, %v896, 0
    %v912 = vsel %vm907, %v897, 0
    %914 = vmatprep.subr.mxu0 0.0
    %915 = vmatpush1.msra.mxu0 %v898
    %916 = vmatprep.subr.mxu0 0.0
    %917 = vmatpush1.msra.mxu0 %v899
    %918 = vmatprep.subr.mxu0 0.0
    %919 = vmatpush1.msra.mxu0 %v900
    %920 = vmatprep.subr.mxu0 0.0
    %921 = vmatpush1.msra.mxu0 %v901
    %922 = vmatprep.subr.mxu0 0.0
    %923 = vmatpush1.msra.mxu0 0.0
    %924 = vmatprep.subr.mxu0 0.0
    %925 = vmatpush1.msra.mxu0 0.0
    %926 = vmatprep.subr.mxu0 0.0
    %927 = vmatpush1.msra.mxu0 0.0
    %928 = vmatprep.subr.mxu0 0.0
    %929 = vmatpush1.msra.mxu0 0.0
    %930 = vmatprep.subr.mxu0 0.0
    %931 = vmatpush1.msra.mxu0 0.0
    %932 = vmatprep.subr.mxu0 0.0
    %933 = vmatpush1.msra.mxu0 0.0
    %934 = vmatprep.subr.mxu0 0.0
    %935 = vmatpush1.msra.mxu0 0.0
    %936 = vmatprep.subr.mxu0 0.0
    %937 = vmatpush1.msra.mxu0 0.0
    %938 = vmatprep.subr.mxu0 0.0
    %939 = vmatpush1.msra.mxu0 0.0
    %940 = vmatprep.subr.mxu0 0.0
    %941 = vmatpush1.msra.mxu0 0.0
    %942 = vmatprep.subr.mxu0 0.0
    %943 = vmatpush1.msra.mxu0 0.0
    %944 = vmatprep.subr.mxu0 0.0
    %945 = vmatpush1.msra.mxu0 0.0
    %946 = vmatprep.subr.mxu0 0.0
    %947 = vmatpush1.msra.mxu0 0.0
    %948 = vmatprep.subr.mxu0 0.0
    %949 = vmatpush1.msra.mxu0 0.0
    %950 = vmatprep.subr.mxu0 0.0
    %951 = vmatpush1.msra.mxu0 0.0
    %952 = vmatprep.subr.mxu0 0.0
    %953 = vmatpush1.msra.mxu0 0.0
    %954 = vmatprep.subr.mxu0 0.0
    %955 = vmatpush1.msra.mxu0 0.0
    %956 = vmatprep.subr.mxu0 0.0
    %957 = vmatpush1.msra.mxu0 0.0
    %958 = vmatprep.subr.mxu0 0.0
    %959 = vmatpush1.msra.mxu0 0.0
    %960 = vmatprep.subr.mxu0 0.0
    %961 = vmatpush1.msra.mxu0 0.0
    %962 = vmatprep.subr.mxu0 0.0
    %963 = vmatpush1.msra.mxu0 0.0
    %964 = vmatprep.subr.mxu0 0.0
    %965 = vmatpush1.msra.mxu0 0.0
    %966 = vmatprep.subr.mxu0 0.0
    %967 = vmatpush1.msra.mxu0 0.0
    %968 = vmatprep.subr.mxu0 0.0
    %969 = vmatpush1.msra.mxu0 0.0
    %970 = vmatprep.subr.mxu0 0.0
    %971 = vmatpush1.msra.mxu0 0.0
    %972 = vmatprep.subr.mxu0 0.0
    %973 = vmatpush1.msra.mxu0 0.0
    %974 = vmatprep.subr.mxu0 0.0
    %975 = vmatpush1.msra.mxu0 0.0
    %976 = vmatprep.subr.mxu0 0.0
    %977 = vmatpush1.msra.mxu0 0.0
    %978 = vmatprep.mubr.f32.mxu0 0.0
    %979 = vmatmul.mubr.f32.gmra.mrb[0].mxu0 %v909
    %v980 = vpop.f32.mrb[0].mxu0
    %v981 = vadd.f32 %v906, %v980
    %v982 = vpop.f32.mrb[0].mxu0
    %983 = vmatprep.mubr.f32.mxu0 0.0
    %984 = vmatmul.mubr.f32.gmra.mrb[0].mxu0 %v912
    %v985 = vpop.f32.mrb[0].mxu0
    %v986 = vadd.f32 %v906, %v985
    %v987 = vpop.f32.mrb[0].mxu0
    %988 = vdwg.mxu0
    %v989 = vmax.f32 %v981, 0.0
    %v990 = vmax.f32 %v986, 0.0
    %v991 = vld [vmem:[%s3 + $0x30] sm:$0xff]
    %v992 = vld [vmem:[%s3 + $0x38] sm:$0xff]
    %v993 = vld [vmem:[%s3 + $0x40] sm:$0xff]
    %v994 = vlaneseq
    %v995 = vshrl.u32 %v994, 7
    %v996 = vsub.s32 0, %v995
    %v997 = vrot.slane %v993, %v996
    %v999 = vsel %vm92, %v989, 0
    %v1002 = vsel %vm92, %v990, 0
    %1004 = vmatprep.subr.mxu0 0.0
    %1005 = vmatpush1.msra.mxu0 %v991
    %1006 = vmatprep.subr.mxu0 0.0
    %1007 = vmatpush1.msra.mxu0 %v992
    %1008 = vmatprep.subr.mxu0 0.0
    %1009 = vmatpush1.msra.mxu0 0.0
    %1010 = vmatprep.subr.mxu0 0.0
    %1011 = vmatpush1.msra.mxu0 0.0
    %1012 = vmatprep.subr.mxu0 0.0
    %1013 = vmatpush1.msra.mxu0 0.0
    %1014 = vmatprep.subr.mxu0 0.0
    %1015 = vmatpush1.msra.mxu0 0.0
    %1016 = vmatprep.subr.mxu0 0.0
    %1017 = vmatpush1.msra.mxu0 0.0
    %1018 = vmatprep.subr.mxu0 0.0
    %1019 = vmatpush1.msra.mxu0 0.0
    %1020 = vmatprep.subr.mxu0 0.0
    %1021 = vmatpush1.msra.mxu0 0.0
    %1022 = vmatprep.subr.mxu0 0.0
    %1023 = vmatpush1.msra.mxu0 0.0
    %1024 = vmatprep.subr.mxu0 0.0
    %1025 = vmatpush1.msra.mxu0 0.0
    %1026 = vmatprep.subr.mxu0 0.0
    %1027 = vmatpush1.msra.mxu0 0.0
    %1028 = vmatprep.subr.mxu0 0.0
    %1029 = vmatpush1.msra.mxu0 0.0
    %1030 = vmatprep.subr.mxu0 0.0
    %1031 = vmatpush1.msra.mxu0 0.0
    %1032 = vmatprep.subr.mxu0 0.0
    %1033 = vmatpush1.msra.mxu0 0.0
    %1034 = vmatprep.subr.mxu0 0.0
    %1035 = vmatpush1.msra.mxu0 0.0
    %1036 = vmatprep.subr.mxu0 0.0
    %1037 = vmatpush1.msra.mxu0 0.0
    %1038 = vmatprep.subr.mxu0 0.0
    %1039 = vmatpush1.msra.mxu0 0.0
    %1040 = vmatprep.subr.mxu0 0.0
    %1041 = vmatpush1.msra.mxu0 0.0
    %1042 = vmatprep.subr.mxu0 0.0
    %1043 = vmatpush1.msra.mxu0 0.0
    %1044 = vmatprep.subr.mxu0 0.0
    %1045 = vmatpush1.msra.mxu0 0.0
    %1046 = vmatprep.subr.mxu0 0.0
    %1047 = vmatpush1.msra.mxu0 0.0
    %1048 = vmatprep.subr.mxu0 0.0
    %1049 = vmatpush1.msra.mxu0 0.0
    %1050 = vmatprep.subr.mxu0 0.0
    %1051 = vmatpush1.msra.mxu0 0.0
    %1052 = vmatprep.subr.mxu0 0.0
    %1053 = vmatpush1.msra.mxu0 0.0
    %1054 = vmatprep.subr.mxu0 0.0
    %1055 = vmatpush1.msra.mxu0 0.0
    %1056 = vmatprep.subr.mxu0 0.0
    %1057 = vmatpush1.msra.mxu0 0.0
    %1058 = vmatprep.subr.mxu0 0.0
    %1059 = vmatpush1.msra.mxu0 0.0
    %1060 = vmatprep.subr.mxu0 0.0
    %1061 = vmatpush1.msra.mxu0 0.0
    %1062 = vmatprep.subr.mxu0 0.0
    %1063 = vmatpush1.msra.mxu0 0.0
    %1064 = vmatprep.subr.mxu0 0.0
    %1065 = vmatpush1.msra.mxu0 0.0
    %1066 = vmatprep.subr.mxu0 0.0
    %1067 = vmatpush1.msra.mxu0 0.0
    %1068 = vmatprep.mubr.f32.mxu0 0.0
    %1069 = vmatmul.mubr.f32.gmra.mrb[0].mxu0 %v999
    %v1070 = vpop.f32.mrb[0].mxu0
    %v1071 = vadd.f32 %v997, %v1070
    %v1072 = vpop.f32.mrb[0].mxu0
    %1073 = vmatprep.mubr.f32.mxu0 0.0
    %1074 = vmatmul.mubr.f32.gmra.mrb[0].mxu0 %v1002
    %v1075 = vpop.f32.mrb[0].mxu0
    %v1076 = vadd.f32 %v997, %v1075
    %v1077 = vpop.f32.mrb[0].mxu0
    %1078 = vdwg.mxu0
    %v1079 = vsub.f32 0.0, %v1071
    %v1080 = vsub.f32 0.0, %v1076
    %v1081 = vmul.f32 %v1079, 1.442695
    %v1082 = vpow.pop %v1081
    %v1083 = vmul.f32 %v1080, 1.442695
    %v1084 = vpow.pop %v1083
    %v1085 = vadd.f32 %v1082, 1.0
    %v1086 = vadd.f32 %v1084, 1.0
    %v1087 = vrcp.pop %v1085
    %v1088 = vrcp.pop %v1086
    %v1089 = vld [vmem:[%s3 + $0x48] sm:$0xff]
    %v1090 = vld [vmem:[%s3 + $0x50] sm:$0xff]
    %v1091 = vld [vmem:[%s3 + $0x58] sm:$0xff]
    %v1092 = vlaneseq
    %v1093 = vshrl.u32 %v1092, 7
    %v1094 = vsub.s32 0, %v1093
    %v1095 = vrot.slane %v1091, %v1094
    %v1097 = vsel %vm92, %v1087, 0
    %v1100 = vsel %vm92, %v1088, 0
    %1102 = vmatprep.subr.mxu0 0.0
    %1103 = vmatpush1.msra.mxu0 %v1089
    %1104 = vmatprep.subr.mxu0 0.0
    %1105 = vmatpush1.msra.mxu0 %v1090
    %1106 = vmatprep.subr.mxu0 0.0
    %1107 = vmatpush1.msra.mxu0 0.0
    %1108 = vmatprep.subr.mxu0 0.0
    %1109 = vmatpush1.msra.mxu0 0.0
    %1110 = vmatprep.subr.mxu0 0.0
    %1111 = vmatpush1.msra.mxu0 0.0
    %1112 = vmatprep.subr.mxu0 0.0
    %1113 = vmatpush1.msra.mxu0 0.0
    %1114 = vmatprep.subr.mxu0 0.0
    %1115 = vmatpush1.msra.mxu0 0.0
    %1116 = vmatprep.subr.mxu0 0.0
    %1117 = vmatpush1.msra.mxu0 0.0
    %1118 = vmatprep.subr.mxu0 0.0
    %1119 = vmatpush1.msra.mxu0 0.0
    %1120 = vmatprep.subr.mxu0 0.0
    %1121 = vmatpush1.msra.mxu0 0.0
    %1122 = vmatprep.subr.mxu0 0.0
    %1123 = vmatpush1.msra.mxu0 0.0
    %1124 = vmatprep.subr.mxu0 0.0
    %1125 = vmatpush1.msra.mxu0 0.0
    %1126 = vmatprep.subr.mxu0 0.0
    %1127 = vmatpush1.msra.mxu0 0.0
    %1128 = vmatprep.subr.mxu0 0.0
    %1129 = vmatpush1.msra.mxu0 0.0
    %1130 = vmatprep.subr.mxu0 0.0
    %1131 = vmatpush1.msra.mxu0 0.0
    %1132 = vmatprep.subr.mxu0 0.0
    %1133 = vmatpush1.msra.mxu0 0.0
    %1134 = vmatprep.subr.mxu0 0.0
    %1135 = vmatpush1.msra.mxu0 0.0
    %1136 = vmatprep.subr.mxu0 0.0
    %1137 = vmatpush1.msra.mxu0 0.0
    %1138 = vmatprep.subr.mxu0 0.0
    %1139 = vmatpush1.msra.mxu0 0.0
    %1140 = vmatprep.subr.mxu0 0.0
    %1141 = vmatpush1.msra.mxu0 0.0
    %1142 = vmatprep.subr.mxu0 0.0
    %1143 = vmatpush1.msra.mxu0 0.0
    %1144 = vmatprep.subr.mxu0 0.0
    %1145 = vmatpush1.msra.mxu0 0.0
    %1146 = vmatprep.subr.mxu0 0.0
    %1147 = vmatpush1.msra.mxu0 0.0
    %1148 = vmatprep.subr.mxu0 0.0
    %1149 = vmatpush1.msra.mxu0 0.0
    %1150 = vmatprep.subr.mxu0 0.0
    %1151 = vmatpush1.msra.mxu0 0.0
    %1152 = vmatprep.subr.mxu0 0.0
    %1153 = vmatpush1.msra.mxu0 0.0
    %1154 = vmatprep.subr.mxu0 0.0
    %1155 = vmatpush1.msra.mxu0 0.0
    %1156 = vmatprep.subr.mxu0 0.0
    %1157 = vmatpush1.msra.mxu0 0.0
    %1158 = vmatprep.subr.mxu0 0.0
    %1159 = vmatpush1.msra.mxu0 0.0
    %1160 = vmatprep.subr.mxu0 0.0
    %1161 = vmatpush1.msra.mxu0 0.0
    %1162 = vmatprep.subr.mxu0 0.0
    %1163 = vmatpush1.msra.mxu0 0.0
    %1164 = vmatprep.subr.mxu0 0.0
    %1165 = vmatpush1.msra.mxu0 0.0
    %1166 = vmatprep.mubr.f32.mxu0 0.0
    %1167 = vmatmul.mubr.f32.gmra.mrb[0].mxu0 %v1097
    %v1168 = vpop.f32.mrb[0].mxu0
    %v1169 = vadd.f32 %v1095, %v1168
    %v1170 = vpop.f32.mrb[0].mxu0
    %1171 = vmatprep.mubr.f32.mxu0 0.0
    %1172 = vmatmul.mubr.f32.gmra.mrb[0].mxu0 %v1100
    %v1173 = vpop.f32.mrb[0].mxu0
    %v1174 = vadd.f32 %v1095, %v1173
    %v1175 = vpop.f32.mrb[0].mxu0
    %1176 = vdwg.mxu0
    %v1177 = vmax.f32 %v1169, 0.0
    %v1178 = vmax.f32 %v1174, 0.0
    %v1179 = vld [vmem:[%s3 + $0x60] sm:$0xff]
    %v1180 = vld [vmem:[%s3 + $0x68] sm:$0xff]
    %v1181 = vld [vmem:[%s3 + $0x70] sm:$0xff]
    %v1182 = vld [vmem:[%s3 + $0x78] sm:$0xff]
    %v1183 = vld [vmem:[%s3 + $0x80] sm:$0xff]
    %v1184 = vlaneseq
    %v1185 = vshrl.u32 %v1184, 7
    %v1186 = vsub.s32 0, %v1185
    %v1187 = vrot.slane %v1183, %v1186
    %v1189 = vsel %vm907, %v1177, 0
    %v1192 = vsel %vm907, %v1178, 0
    %1194 = vmatprep.subr.mxu0 0.0
    %1195 = vmatpush1.msra.mxu0 %v1179
    %1196 = vmatprep.subr.mxu0 0.0
    %1197 = vmatpush1.msra.mxu0 %v1180
    %1198 = vmatprep.subr.mxu0 0.0
    %1199 = vmatpush1.msra.mxu0 %v1181
    %1200 = vmatprep.subr.mxu0 0.0
    %1201 = vmatpush1.msra.mxu0 %v1182
    %1202 = vmatprep.subr.mxu0 0.0
    %1203 = vmatpush1.msra.mxu0 0.0
    %1204 = vmatprep.subr.mxu0 0.0
    %1205 = vmatpush1.msra.mxu0 0.0
    %1206 = vmatprep.subr.mxu0 0.0
    %1207 = vmatpush1.msra.mxu0 0.0
    %1208 = vmatprep.subr.mxu0 0.0
    %1209 = vmatpush1.msra.mxu0 0.0
    %1210 = vmatprep.subr.mxu0 0.0
    %1211 = vmatpush1.msra.mxu0 0.0
    %1212 = vmatprep.subr.mxu0 0.0
    %1213 = vmatpush1.msra.mxu0 0.0
    %1214 = vmatprep.subr.mxu0 0.0
    %1215 = vmatpush1.msra.mxu0 0.0
    %1216 = vmatprep.subr.mxu0 0.0
    %1217 = vmatpush1.msra.mxu0 0.0
    %1218 = vmatprep.subr.mxu0 0.0
    %1219 = vmatpush1.msra.mxu0 0.0
    %1220 = vmatprep.subr.mxu0 0.0
    %1221 = vmatpush1.msra.mxu0 0.0
    %1222 = vmatprep.subr.mxu0 0.0
    %1223 = vmatpush1.msra.mxu0 0.0
    %1224 = vmatprep.subr.mxu0 0.0
    %1225 = vmatpush1.msra.mxu0 0.0
    %1226 = vmatprep.subr.mxu0 0.0
    %1227 = vmatpush1.msra.mxu0 0.0
    %1228 = vmatprep.subr.mxu0 0.0
    %1229 = vmatpush1.msra.mxu0 0.0
    %1230 = vmatprep.subr.mxu0 0.0
    %1231 = vmatpush1.msra.mxu0 0.0
    %1232 = vmatprep.subr.mxu0 0.0
    %1233 = vmatpush1.msra.mxu0 0.0
    %1234 = vmatprep.subr.mxu0 0.0
    %1235 = vmatpush1.msra.mxu0 0.0
    %1236 = vmatprep.subr.mxu0 0.0
    %1237 = vmatpush1.msra.mxu0 0.0
    %1238 = vmatprep.subr.mxu0 0.0
    %1239 = vmatpush1.msra.mxu0 0.0
    %1240 = vmatprep.subr.mxu0 0.0
    %1241 = vmatpush1.msra.mxu0 0.0
    %1242 = vmatprep.subr.mxu0 0.0
    %1243 = vmatpush1.msra.mxu0 0.0
    %1244 = vmatprep.subr.mxu0 0.0
    %1245 = vmatpush1.msra.mxu0 0.0
    %1246 = vmatprep.subr.mxu0 0.0
    %1247 = vmatpush1.msra.mxu0 0.0
    %1248 = vmatprep.subr.mxu0 0.0
    %1249 = vmatpush1.msra.mxu0 0.0
    %1250 = vmatprep.subr.mxu0 0.0
    %1251 = vmatpush1.msra.mxu0 0.0
    %1252 = vmatprep.subr.mxu0 0.0
    %1253 = vmatpush1.msra.mxu0 0.0
    %1254 = vmatprep.subr.mxu0 0.0
    %1255 = vmatpush1.msra.mxu0 0.0
    %1256 = vmatprep.subr.mxu0 0.0
    %1257 = vmatpush1.msra.mxu0 0.0
    %1258 = vmatprep.mubr.f32.mxu0 0.0
    %1259 = vmatmul.mubr.f32.gmra.mrb[0].mxu0 %v1189
    %v1260 = vpop.f32.mrb[0].mxu0
    %v1261 = vadd.f32 %v1187, %v1260
    %v1262 = vpop.f32.mrb[0].mxu0
    %1263 = vmatprep.mubr.f32.mxu0 0.0
    %1264 = vmatmul.mubr.f32.gmra.mrb[0].mxu0 %v1192
    %v1265 = vpop.f32.mrb[0].mxu0
    %v1266 = vadd.f32 %v1187, %v1265
    %v1267 = vpop.f32.mrb[0].mxu0
    %1268 = vdwg.mxu0
    %1271 = vrot.lane.b32.xlu0 %v1261, 16
    %v1272 = vpop.permute.xlu0 %1271
    %1273 = vrot.lane.b32.xlu0 %v1266, 16
    %v1274 = vpop.permute.xlu0 %1273
    %v1277 = vsel %vm92, %v1087, %v1272
    %v1278 = vsel %vm92, %v1088, %v1274
    %vm1279 = vcmask 195584
    %1280 = vst.msk [vmem:[%s4] sm:$0xff] %vm1279, %v1277
    %1281 = vst.msk [vmem:[%s4 + $0x8] sm:$0xff] %vm1279, %v1278
    // Predicated region
    $region22: #{graph_transformer_forward.1} parent=1 // pred_check
      _
    $region23: #{graph_transformer_forward.1} parent=1 // pred_check_branch
      %1283 = sbr.rel (0) target = $region25
    $region24: #{graph_transformer_forward.1} parent=1 // pred_region
      _
    $region25: #{graph_transformer_forward.1} parent=1 // pred_fallthru
      _
    // Predicated region
    $region26: #{graph_transformer_forward.1} parent=1 // pred_check
      _
    $region27: #{graph_transformer_forward.1} parent=1 // pred_check_branch
      %1285 = sbr.rel (0) target = $region29
    $region28: #{graph_transformer_forward.1} parent=1 // pred_region
      _
    $region29: #{graph_transformer_forward.1} parent=1 // pred_fallthru
      _
    %1286 = vsyncpa [#allocation3], 1

</llo_original>
